<compile_context>
chip_gen: v5e
topology: v5e:2x2
jax: 0.10.0
libtpu: 0.0.40
codegen_flags: <defaults>
</compile_context>

<pallas_src>
import jax
import jax.numpy as jnp
from jax.experimental import pallas as pl
from jax.experimental.pallas import tpu as pltpu

# ----------------------------- tiny GPT2 config -----------------------------
B, T = 2, 8          # batch, sequence length
D = 64               # hidden size
H = 4                # attention heads
HD = D // H          # head dim
L = 2                # transformer layers
V = 128              # vocab size
MLP = 4 * D          # MLP inner dim
C = 4                # class_nums for the classifier head

C_PAD = 128          # classifier lanes padded to a full 128-lane vreg
OUT_ROWS = 8         # sublane padding for the logits output block
LN_EPS = 1e-5


# ------------------------------ fused Pallas kernel ------------------------------
def _ln(x):
    """Affine-free f32 LayerNorm over last dim (gamma/beta folded into weights)."""
    mu = jnp.mean(x, axis=-1, keepdims=True)
    var = jnp.mean(jnp.square(x - mu), axis=-1, keepdims=True)
    return (x - mu) * jax.lax.rsqrt(var + LN_EPS)


def _mm(x_f32, w_bf16):
    """bf16 MXU matmul with f32 accumulation."""
    return jnp.dot(x_f32.astype(jnp.bfloat16), w_bf16,
                   preferred_element_type=jnp.float32)


def _gpt2_kernel(x_ref,
                 attn_w_ref, attn_b_ref, proj_w_ref, proj_b_ref,
                 fc_w_ref, fc_b_ref, mlp_w_ref, mlp_b_ref,
                 cls_w_ref, cls_b_ref,
                 out_ref):
    """Whole GPT2 forward (post-embedding), whole batch, fully VMEM resident."""
    x = x_ref[...]                                                      # [B*T, D] f32

    # causal mask as an additive bias, hoisted once (vadd per head instead of cmp+sel)
    row = jax.lax.broadcasted_iota(jnp.int32, (T, T), 0)
    col = jax.lax.broadcasted_iota(jnp.int32, (T, T), 1)
    mask_bias = jnp.where(col <= row, 0.0, -1e30).astype(jnp.float32)   # [T, T]

    for l in range(L):
        # --- attention sub-block (pre-LN; ln1 affine + 1/sqrt(hd) folded into weights)
        a = _ln(x)
        qkv = _mm(a, attn_w_ref[l]) + attn_b_ref[l]                     # [B*T, 3D] f32

        attn_rows = []
        for b in range(B):
            qkv_b = qkv[b * T:(b + 1) * T, :].astype(jnp.bfloat16)      # one cast per row-group
            heads = []
            for h in range(H):
                # static lane slices of the QKV slab (no transposes, no scratch)
                q = qkv_b[:, h * HD:(h + 1) * HD]                       # scale pre-folded
                k = qkv_b[:, D + h * HD: D + (h + 1) * HD]
                v = qkv_b[:, 2 * D + h * HD: 2 * D + (h + 1) * HD]
                s = jax.lax.dot_general(                                # q @ k^T -> [T, T] f32
                    q, k, (((1,), (1,)), ((), ())),
                    preferred_element_type=jnp.float32)
                s = s + mask_bias
                s = s - jnp.max(s, axis=-1, keepdims=True)
                p = jnp.exp(s)
                p = p * pl.reciprocal(jnp.sum(p, axis=-1, keepdims=True), approx=True)
                heads.append(jnp.dot(p.astype(jnp.bfloat16), v,
                                     preferred_element_type=jnp.float32))   # [T, HD]
            attn_rows.append(jnp.concatenate(heads, axis=-1))           # [T, D] (in vregs)
        attn_out = jnp.concatenate(attn_rows, axis=0)                   # [B*T, D]

        o = _mm(attn_out, proj_w_ref[l]) + proj_b_ref[l]                # [B*T, D]
        x = x + o                                                       # residual

        # --- MLP sub-block (ln2 affine folded into fc weights)
        m = _ln(x)
        m = _mm(m, fc_w_ref[l]) + fc_b_ref[l]                           # [B*T, MLP]
        m = jax.nn.gelu(m, approximate=True)                            # GPT2 "gelu_new"
        m = _mm(m, mlp_w_ref[l]) + mlp_b_ref[l]                         # [B*T, D]
        x = x + m                                                       # residual

    # last-token pooling BEFORE the final LN (ln_f affine folded into classifier)
    last = jnp.concatenate([x[b * T + T - 1: b * T + T, :] for b in range(B)],
                           axis=0)                                      # [B, D]
    last = _ln(last)
    # dropout: identity in eval mode
    logits = _mm(last, cls_w_ref[...]) + cls_b_ref[...]                 # [B, C_PAD] f32

    # single lane/sublane-dense unmasked (8,128) store; rows B.. are padding
    out_ref[...] = jnp.concatenate(
        [logits, jnp.zeros((OUT_ROWS - B, C_PAD), jnp.float32)],
        axis=0).astype(out_ref.dtype)


# ---------------------------- parameter creation ----------------------------
def init_params(key):
    """Raw (PyTorch-style) parameters in f32."""
    def normal(k, shape):
        return jax.random.normal(k, shape, jnp.float32) * 0.02

    keys = jax.random.split(key, 7)
    return dict(
        wte=normal(keys[0], (V, D)),
        wpe=normal(keys[1], (T, D)),
        ln1_g=jnp.ones((L, D)), ln1_b=jnp.zeros((L, D)),
        ln2_g=jnp.ones((L, D)), ln2_b=jnp.zeros((L, D)),
        ln_f_g=jnp.ones((D,)),  ln_f_b=jnp.zeros((D,)),
        attn_w=normal(keys[2], (L, D, 3 * D)), attn_b=jnp.zeros((L, 3 * D)),
        proj_w=normal(keys[3], (L, D, D)),     proj_b=jnp.zeros((L, D)),
        fc_w=normal(keys[4], (L, D, MLP)),     fc_b=jnp.zeros((L, MLP)),
        mlp_w=normal(keys[5], (L, MLP, D)),    mlp_b=jnp.zeros((L, D)),
        cls_w=normal(keys[6], (D, C)),         cls_b=jnp.zeros((C,)),
    )


def fold_params(p):
    """Inference-only transform: fold LN affines + attention scale into the following
    matmul weights/biases; pad classifier lanes to 128; cast matmul weights to bf16."""
    scale = 1.0 / (HD ** 0.5)

    # ln1 -> c_attn, with 1/sqrt(hd) folded into the Q columns
    attn_w = p["ln1_g"][:, :, None] * p["attn_w"]                       # [L, D, 3D]
    attn_b = p["attn_b"] + jnp.einsum("ld,ldk->lk", p["ln1_b"], p["attn_w"])
    attn_w = attn_w.at[:, :, :D].multiply(scale)
    attn_b = attn_b.at[:, :D].multiply(scale)

    # ln2 -> c_fc
    fc_w = p["ln2_g"][:, :, None] * p["fc_w"]
    fc_b = p["fc_b"] + jnp.einsum("ld,ldk->lk", p["ln2_b"], p["fc_w"])

    # ln_f -> classifier, padded to 128 lanes
    cls_w = p["ln_f_g"][:, None] * p["cls_w"]                           # [D, C]
    cls_b = p["cls_b"] + p["ln_f_b"] @ p["cls_w"]                       # [C]
    cls_w = jnp.zeros((D, C_PAD), jnp.float32).at[:, :C].set(cls_w)
    cls_b = jnp.zeros((1, C_PAD), jnp.float32).at[0, :C].set(cls_b)

    wdt = jnp.bfloat16
    return dict(
        wte=p["wte"], wpe=p["wpe"],
        attn_w=attn_w.astype(wdt), attn_b=attn_b[:, None, :],           # [L, 1, 3D]
        proj_w=p["proj_w"].astype(wdt), proj_b=p["proj_b"][:, None, :],
        fc_w=fc_w.astype(wdt), fc_b=fc_b[:, None, :],
        mlp_w=p["mlp_w"].astype(wdt), mlp_b=p["mlp_b"][:, None, :],
        cls_w=cls_w.astype(wdt), cls_b=cls_b,
    )


# --------------------------------- forward ----------------------------------
@jax.jit
def gpt2_forward(params, tokens):
    """tokens: int32 [B, T] -> classifier logits [B, C]."""
    # token + position embeddings (gather = glue, stays in JAX)
    x = params["wte"][tokens] + params["wpe"][None, :, :]               # [B, T, D] f32
    x = x.reshape(B * T, D)                                             # stacked rows

    weight_args = (params["attn_w"], params["attn_b"], params["proj_w"], params["proj_b"],
                   params["fc_w"], params["fc_b"], params["mlp_w"], params["mlp_b"],
                   params["cls_w"], params["cls_b"])

    def full(shape):
        zeros = (0,) * len(shape)
        return pl.BlockSpec(shape, lambda i, zeros=zeros: zeros)

    # rough cost hint so XLA schedules the custom call sensibly
    flops = L * (2 * B * T * D * 3 * D                    # qkv
                 + B * H * (4 * T * T * HD)               # qk^T + p@v
                 + 2 * B * T * D * D                      # attn proj
                 + 2 * B * T * D * MLP                    # fc
                 + 2 * B * T * MLP * D)                   # mlp proj
    flops += 2 * B * D * C_PAD                            # classifier
    bytes_accessed = int(x.size * x.dtype.itemsize
                         + sum(w.size * w.dtype.itemsize for w in weight_args)
                         + OUT_ROWS * C_PAD * 4)
    cost = pl.CostEstimate(flops=flops,
                           transcendentals=L * (B * H * T * T + B * T * MLP),
                           bytes_accessed=bytes_accessed)

    out = pl.pallas_call(
        _gpt2_kernel,
        out_shape=jax.ShapeDtypeStruct((OUT_ROWS, C_PAD), jnp.float32),
        grid=(1,),
        in_specs=[full((B * T, D))] + [full(w.shape) for w in weight_args],
        out_specs=full((OUT_ROWS, C_PAD)),
        compiler_params=pltpu.CompilerParams(dimension_semantics=("arbitrary",)),
        cost_estimate=cost,
    )(x, *weight_args)

    return out[:B, :C]                                                  # [B, C]


# ----------------------------------- main ------------------------------------
if __name__ == "__main__":
    key = jax.random.PRNGKey(0)
    pkey, tkey = jax.random.split(key)
    params = fold_params(init_params(pkey))
    tokens = jax.random.randint(tkey, (B, T), 0, V, dtype=jnp.int32)

    logits = gpt2_forward(params, tokens)
    jax.block_until_ready(logits)
    assert logits.shape == (B, C), logits.shape
    print("KERNEL_OK")
</pallas_src>

<mosaic_0001>
module attributes {stable_mosaic.version = 11 : i64} {
  func.func @_gpt2_kernel(%arg0: i32, %arg1: memref<16x64xf32, #tpu.memory_space<vmem>>, %arg2: memref<2x64x192xbf16, #tpu.memory_space<vmem>>, %arg3: memref<2x1x192xf32, #tpu.memory_space<vmem>>, %arg4: memref<2x64x64xbf16, #tpu.memory_space<vmem>>, %arg5: memref<2x1x64xf32, #tpu.memory_space<vmem>>, %arg6: memref<2x64x256xbf16, #tpu.memory_space<vmem>>, %arg7: memref<2x1x256xf32, #tpu.memory_space<vmem>>, %arg8: memref<2x256x64xbf16, #tpu.memory_space<vmem>>, %arg9: memref<2x1x64xf32, #tpu.memory_space<vmem>>, %arg10: memref<64x128xbf16, #tpu.memory_space<vmem>>, %arg11: memref<1x128xf32, #tpu.memory_space<vmem>>, %arg12: memref<8x128xf32, #tpu.memory_space<vmem>>) attributes {dimension_semantics = [#tpu.dimension_semantics<arbitrary>], iteration_bounds = array<i64: 1>, scalar_prefetch = 0 : i64, scratch_operands = 0 : i64, tpu.core_type = #tpu.core_type<tc>, window_params = [{pipeline_mode = #tpu.pipeline_mode<synchronous>, transform_indices = @transform_0, window_bounds = array<i64: 16, 64>}, {pipeline_mode = #tpu.pipeline_mode<synchronous>, transform_indices = @transform_1, window_bounds = array<i64: 2, 64, 192>}, {pipeline_mode = #tpu.pipeline_mode<synchronous>, transform_indices = @transform_2, window_bounds = array<i64: 2, 1, 192>}, {pipeline_mode = #tpu.pipeline_mode<synchronous>, transform_indices = @transform_3, window_bounds = array<i64: 2, 64, 64>}, {pipeline_mode = #tpu.pipeline_mode<synchronous>, transform_indices = @transform_4, window_bounds = array<i64: 2, 1, 64>}, {pipeline_mode = #tpu.pipeline_mode<synchronous>, transform_indices = @transform_5, window_bounds = array<i64: 2, 64, 256>}, {pipeline_mode = #tpu.pipeline_mode<synchronous>, transform_indices = @transform_6, window_bounds = array<i64: 2, 1, 256>}, {pipeline_mode = #tpu.pipeline_mode<synchronous>, transform_indices = @transform_7, window_bounds = array<i64: 2, 256, 64>}, {pipeline_mode = #tpu.pipeline_mode<synchronous>, transform_indices = @transform_8, window_bounds = array<i64: 2, 1, 64>}, {pipeline_mode = #tpu.pipeline_mode<synchronous>, transform_indices = @transform_9, window_bounds = array<i64: 64, 128>}, {pipeline_mode = #tpu.pipeline_mode<synchronous>, transform_indices = @transform_10, window_bounds = array<i64: 1, 128>}, {pipeline_mode = #tpu.pipeline_mode<synchronous>, transform_indices = @transform_11, window_bounds = array<i64: 8, 128>}]} {
    %c0 = arith.constant 0 : index
    %c0_0 = arith.constant 0 : index
    %0 = vector.load %arg1[%c0, %c0_0] : memref<16x64xf32, #tpu.memory_space<vmem>>, vector<16x64xf32>
    %1 = tpu.iota {dimensions = array<i32: 0>} : vector<8x8xi32>
    %2 = tpu.iota {dimensions = array<i32: 1>} : vector<8x8xi32>
    %3 = arith.cmpi sle, %2, %1 : vector<8x8xi32>
    %cst = arith.constant 0.000000e+00 : f32
    %cst_1 = arith.constant -1.000000e+30 : f32
    %4 = vector.broadcast %cst : f32 to vector<8x8xf32>
    %5 = vector.broadcast %cst_1 : f32 to vector<8x8xf32>
    %6 = arith.select %3, %4, %5 : vector<8x8xi1>, vector<8x8xf32>
    %cst_2 = arith.constant dense<0.000000e+00> : vector<16xf32>
    %7 = vector.multi_reduction <add>, %0, %cst_2 [1] : vector<16x64xf32> to vector<16xf32>
    %8 = vector.shape_cast %7 : vector<16xf32> to vector<16x1xf32>
    %cst_3 = arith.constant 6.400000e+01 : f32
    %9 = vector.broadcast %cst_3 : f32 to vector<16x1xf32>
    %10 = arith.divf %8, %9 : vector<16x1xf32>
    %11 = vector.broadcast %10 : vector<16x1xf32> to vector<16x64xf32>
    %12 = arith.subf %0, %11 : vector<16x64xf32>
    %13 = arith.mulf %12, %12 : vector<16x64xf32>
    %cst_4 = arith.constant dense<0.000000e+00> : vector<16xf32>
    %14 = vector.multi_reduction <add>, %13, %cst_4 [1] : vector<16x64xf32> to vector<16xf32>
    %15 = vector.shape_cast %14 : vector<16xf32> to vector<16x1xf32>
    %cst_5 = arith.constant 6.400000e+01 : f32
    %16 = vector.broadcast %cst_5 : f32 to vector<16x1xf32>
    %17 = arith.divf %15, %16 : vector<16x1xf32>
    %18 = vector.broadcast %10 : vector<16x1xf32> to vector<16x64xf32>
    %19 = arith.subf %0, %18 : vector<16x64xf32>
    %cst_6 = arith.constant 9.99999974E-6 : f32
    %20 = vector.broadcast %cst_6 : f32 to vector<16x1xf32>
    %21 = arith.addf %17, %20 : vector<16x1xf32>
    %22 = math.rsqrt %21 : vector<16x1xf32>
    %23 = vector.broadcast %22 : vector<16x1xf32> to vector<16x64xf32>
    %24 = arith.mulf %19, %23 : vector<16x64xf32>
    %c0_7 = arith.constant 0 : index
    %c0_8 = arith.constant 0 : index
    %c0_9 = arith.constant 0 : index
    %25 = vector.load %arg2[%c0_7, %c0_8, %c0_9] : memref<2x64x192xbf16, #tpu.memory_space<vmem>>, vector<1x64x192xbf16>
    %26 = vector.shape_cast %25 : vector<1x64x192xbf16> to vector<64x192xbf16>
    %27 = arith.truncf %24 : vector<16x64xf32> to vector<16x64xbf16>
    %cst_10 = arith.constant dense<0.000000e+00> : vector<16x192xf32>
    %28 = tpu.matmul %27, %26, %cst_10 {dimension_numbers = #tpu.dot_dimension_numbers<[1], [0], [0], [1], [0, 0, 1, 1], [], []>} : vector<16x64xbf16>, vector<64x192xbf16>, vector<16x192xf32> -> vector<16x192xf32>
    %c0_11 = arith.constant 0 : index
    %c0_12 = arith.constant 0 : index
    %c0_13 = arith.constant 0 : index
    %29 = vector.load %arg3[%c0_11, %c0_12, %c0_13] : memref<2x1x192xf32, #tpu.memory_space<vmem>>, vector<1x1x192xf32>
    %30 = vector.shape_cast %29 : vector<1x1x192xf32> to vector<1x192xf32>
    %31 = vector.broadcast %30 : vector<1x192xf32> to vector<16x192xf32>
    %32 = arith.addf %28, %31 : vector<16x192xf32>
    %33 = vector.extract_strided_slice %32 {offsets = [0, 0], sizes = [8, 192], strides = [1, 1]} : vector<16x192xf32> to vector<8x192xf32>
    %34 = arith.truncf %33 : vector<8x192xf32> to vector<8x192xbf16>
    %35 = vector.extract_strided_slice %34 {offsets = [0, 0], sizes = [8, 16], strides = [1, 1]} : vector<8x192xbf16> to vector<8x16xbf16>
    %36 = vector.extract_strided_slice %34 {offsets = [0, 64], sizes = [8, 16], strides = [1, 1]} : vector<8x192xbf16> to vector<8x16xbf16>
    %37 = vector.extract_strided_slice %34 {offsets = [0, 128], sizes = [8, 16], strides = [1, 1]} : vector<8x192xbf16> to vector<8x16xbf16>
    %cst_14 = arith.constant dense<0.000000e+00> : vector<8x8xf32>
    %38 = tpu.matmul %35, %36, %cst_14 {dimension_numbers = #tpu.dot_dimension_numbers<[1], [1], [0], [0], [0, 0, 1, 0], [], []>} : vector<8x16xbf16>, vector<8x16xbf16>, vector<8x8xf32> -> vector<8x8xf32>
    %39 = arith.addf %38, %6 : vector<8x8xf32>
    %cst_15 = arith.constant dense<0xFF800000> : vector<8xf32>
    %40 = vector.multi_reduction <maximumf>, %39, %cst_15 [1] : vector<8x8xf32> to vector<8xf32>
    %41 = vector.shape_cast %40 : vector<8xf32> to vector<8x1xf32>
    %42 = vector.broadcast %41 : vector<8x1xf32> to vector<8x8xf32>
    %43 = arith.subf %39, %42 : vector<8x8xf32>
    %44 = math.exp %43 : vector<8x8xf32>
    %cst_16 = arith.constant dense<0.000000e+00> : vector<8xf32>
    %45 = vector.multi_reduction <add>, %44, %cst_16 [1] : vector<8x8xf32> to vector<8xf32>
    %46 = vector.shape_cast %45 : vector<8xf32> to vector<8x1xf32>
    %47 = tpu.reciprocal %46 {approx = true} : vector<8x1xf32> -> vector<8x1xf32>
    %48 = vector.broadcast %47 : vector<8x1xf32> to vector<8x8xf32>
    %49 = arith.mulf %44, %48 : vector<8x8xf32>
    %50 = arith.truncf %49 : vector<8x8xf32> to vector<8x8xbf16>
    %cst_17 = arith.constant dense<0.000000e+00> : vector<8x16xf32>
    %51 = tpu.matmul %50, %37, %cst_17 {dimension_numbers = #tpu.dot_dimension_numbers<[1], [0], [0], [1], [0, 0, 1, 1], [], []>} : vector<8x8xbf16>, vector<8x16xbf16>, vector<8x16xf32> -> vector<8x16xf32>
    %52 = vector.extract_strided_slice %34 {offsets = [0, 16], sizes = [8, 16], strides = [1, 1]} : vector<8x192xbf16> to vector<8x16xbf16>
    %53 = vector.extract_strided_slice %34 {offsets = [0, 80], sizes = [8, 16], strides = [1, 1]} : vector<8x192xbf16> to vector<8x16xbf16>
    %54 = vector.extract_strided_slice %34 {offsets = [0, 144], sizes = [8, 16], strides = [1, 1]} : vector<8x192xbf16> to vector<8x16xbf16>
    %cst_18 = arith.constant dense<0.000000e+00> : vector<8x8xf32>
    %55 = tpu.matmul %52, %53, %cst_18 {dimension_numbers = #tpu.dot_dimension_numbers<[1], [1], [0], [0], [0, 0, 1, 0], [], []>} : vector<8x16xbf16>, vector<8x16xbf16>, vector<8x8xf32> -> vector<8x8xf32>
    %56 = arith.addf %55, %6 : vector<8x8xf32>
    %cst_19 = arith.constant dense<0xFF800000> : vector<8xf32>
    %57 = vector.multi_reduction <maximumf>, %56, %cst_19 [1] : vector<8x8xf32> to vector<8xf32>
    %58 = vector.shape_cast %57 : vector<8xf32> to vector<8x1xf32>
    %59 = vector.broadcast %58 : vector<8x1xf32> to vector<8x8xf32>
    %60 = arith.subf %56, %59 : vector<8x8xf32>
    %61 = math.exp %60 : vector<8x8xf32>
    %cst_20 = arith.constant dense<0.000000e+00> : vector<8xf32>
    %62 = vector.multi_reduction <add>, %61, %cst_20 [1] : vector<8x8xf32> to vector<8xf32>
    %63 = vector.shape_cast %62 : vector<8xf32> to vector<8x1xf32>
    %64 = tpu.reciprocal %63 {approx = true} : vector<8x1xf32> -> vector<8x1xf32>
    %65 = vector.broadcast %64 : vector<8x1xf32> to vector<8x8xf32>
    %66 = arith.mulf %61, %65 : vector<8x8xf32>
    %67 = arith.truncf %66 : vector<8x8xf32> to vector<8x8xbf16>
    %cst_21 = arith.constant dense<0.000000e+00> : vector<8x16xf32>
    %68 = tpu.matmul %67, %54, %cst_21 {dimension_numbers = #tpu.dot_dimension_numbers<[1], [0], [0], [1], [0, 0, 1, 1], [], []>} : vector<8x8xbf16>, vector<8x16xbf16>, vector<8x16xf32> -> vector<8x16xf32>
    %69 = vector.extract_strided_slice %34 {offsets = [0, 32], sizes = [8, 16], strides = [1, 1]} : vector<8x192xbf16> to vector<8x16xbf16>
    %70 = vector.extract_strided_slice %34 {offsets = [0, 96], sizes = [8, 16], strides = [1, 1]} : vector<8x192xbf16> to vector<8x16xbf16>
    %71 = vector.extract_strided_slice %34 {offsets = [0, 160], sizes = [8, 16], strides = [1, 1]} : vector<8x192xbf16> to vector<8x16xbf16>
    %cst_22 = arith.constant dense<0.000000e+00> : vector<8x8xf32>
    %72 = tpu.matmul %69, %70, %cst_22 {dimension_numbers = #tpu.dot_dimension_numbers<[1], [1], [0], [0], [0, 0, 1, 0], [], []>} : vector<8x16xbf16>, vector<8x16xbf16>, vector<8x8xf32> -> vector<8x8xf32>
    %73 = arith.addf %72, %6 : vector<8x8xf32>
    %cst_23 = arith.constant dense<0xFF800000> : vector<8xf32>
    %74 = vector.multi_reduction <maximumf>, %73, %cst_23 [1] : vector<8x8xf32> to vector<8xf32>
    %75 = vector.shape_cast %74 : vector<8xf32> to vector<8x1xf32>
    %76 = vector.broadcast %75 : vector<8x1xf32> to vector<8x8xf32>
    %77 = arith.subf %73, %76 : vector<8x8xf32>
    %78 = math.exp %77 : vector<8x8xf32>
    %cst_24 = arith.constant dense<0.000000e+00> : vector<8xf32>
    %79 = vector.multi_reduction <add>, %78, %cst_24 [1] : vector<8x8xf32> to vector<8xf32>
    %80 = vector.shape_cast %79 : vector<8xf32> to vector<8x1xf32>
    %81 = tpu.reciprocal %80 {approx = true} : vector<8x1xf32> -> vector<8x1xf32>
    %82 = vector.broadcast %81 : vector<8x1xf32> to vector<8x8xf32>
    %83 = arith.mulf %78, %82 : vector<8x8xf32>
    %84 = arith.truncf %83 : vector<8x8xf32> to vector<8x8xbf16>
    %cst_25 = arith.constant dense<0.000000e+00> : vector<8x16xf32>
    %85 = tpu.matmul %84, %71, %cst_25 {dimension_numbers = #tpu.dot_dimension_numbers<[1], [0], [0], [1], [0, 0, 1, 1], [], []>} : vector<8x8xbf16>, vector<8x16xbf16>, vector<8x16xf32> -> vector<8x16xf32>
    %86 = vector.extract_strided_slice %34 {offsets = [0, 48], sizes = [8, 16], strides = [1, 1]} : vector<8x192xbf16> to vector<8x16xbf16>
    %87 = vector.extract_strided_slice %34 {offsets = [0, 112], sizes = [8, 16], strides = [1, 1]} : vector<8x192xbf16> to vector<8x16xbf16>
    %88 = vector.extract_strided_slice %34 {offsets = [0, 176], sizes = [8, 16], strides = [1, 1]} : vector<8x192xbf16> to vector<8x16xbf16>
    %cst_26 = arith.constant dense<0.000000e+00> : vector<8x8xf32>
    %89 = tpu.matmul %86, %87, %cst_26 {dimension_numbers = #tpu.dot_dimension_numbers<[1], [1], [0], [0], [0, 0, 1, 0], [], []>} : vector<8x16xbf16>, vector<8x16xbf16>, vector<8x8xf32> -> vector<8x8xf32>
    %90 = arith.addf %89, %6 : vector<8x8xf32>
    %cst_27 = arith.constant dense<0xFF800000> : vector<8xf32>
    %91 = vector.multi_reduction <maximumf>, %90, %cst_27 [1] : vector<8x8xf32> to vector<8xf32>
    %92 = vector.shape_cast %91 : vector<8xf32> to vector<8x1xf32>
    %93 = vector.broadcast %92 : vector<8x1xf32> to vector<8x8xf32>
    %94 = arith.subf %90, %93 : vector<8x8xf32>
    %95 = math.exp %94 : vector<8x8xf32>
    %cst_28 = arith.constant dense<0.000000e+00> : vector<8xf32>
    %96 = vector.multi_reduction <add>, %95, %cst_28 [1] : vector<8x8xf32> to vector<8xf32>
    %97 = vector.shape_cast %96 : vector<8xf32> to vector<8x1xf32>
    %98 = tpu.reciprocal %97 {approx = true} : vector<8x1xf32> -> vector<8x1xf32>
    %99 = vector.broadcast %98 : vector<8x1xf32> to vector<8x8xf32>
    %100 = arith.mulf %95, %99 : vector<8x8xf32>
    %101 = arith.truncf %100 : vector<8x8xf32> to vector<8x8xbf16>
    %cst_29 = arith.constant dense<0.000000e+00> : vector<8x16xf32>
    %102 = tpu.matmul %101, %88, %cst_29 {dimension_numbers = #tpu.dot_dimension_numbers<[1], [0], [0], [1], [0, 0, 1, 1], [], []>} : vector<8x8xbf16>, vector<8x16xbf16>, vector<8x16xf32> -> vector<8x16xf32>
    %103 = tpu.concatenate %51, %68, %85, %102 in 1 : vector<8x16xf32>, vector<8x16xf32>, vector<8x16xf32>, vector<8x16xf32> -> vector<8x64xf32>
    %104 = vector.extract_strided_slice %32 {offsets = [8, 0], sizes = [8, 192], strides = [1, 1]} : vector<16x192xf32> to vector<8x192xf32>
    %105 = arith.truncf %104 : vector<8x192xf32> to vector<8x192xbf16>
    %106 = vector.extract_strided_slice %105 {offsets = [0, 0], sizes = [8, 16], strides = [1, 1]} : vector<8x192xbf16> to vector<8x16xbf16>
    %107 = vector.extract_strided_slice %105 {offsets = [0, 64], sizes = [8, 16], strides = [1, 1]} : vector<8x192xbf16> to vector<8x16xbf16>
    %108 = vector.extract_strided_slice %105 {offsets = [0, 128], sizes = [8, 16], strides = [1, 1]} : vector<8x192xbf16> to vector<8x16xbf16>
    %cst_30 = arith.constant dense<0.000000e+00> : vector<8x8xf32>
    %109 = tpu.matmul %106, %107, %cst_30 {dimension_numbers = #tpu.dot_dimension_numbers<[1], [1], [0], [0], [0, 0, 1, 0], [], []>} : vector<8x16xbf16>, vector<8x16xbf16>, vector<8x8xf32> -> vector<8x8xf32>
    %110 = arith.addf %109, %6 : vector<8x8xf32>
    %cst_31 = arith.constant dense<0xFF800000> : vector<8xf32>
    %111 = vector.multi_reduction <maximumf>, %110, %cst_31 [1] : vector<8x8xf32> to vector<8xf32>
    %112 = vector.shape_cast %111 : vector<8xf32> to vector<8x1xf32>
    %113 = vector.broadcast %112 : vector<8x1xf32> to vector<8x8xf32>
    %114 = arith.subf %110, %113 : vector<8x8xf32>
    %115 = math.exp %114 : vector<8x8xf32>
    %cst_32 = arith.constant dense<0.000000e+00> : vector<8xf32>
    %116 = vector.multi_reduction <add>, %115, %cst_32 [1] : vector<8x8xf32> to vector<8xf32>
    %117 = vector.shape_cast %116 : vector<8xf32> to vector<8x1xf32>
    %118 = tpu.reciprocal %117 {approx = true} : vector<8x1xf32> -> vector<8x1xf32>
    %119 = vector.broadcast %118 : vector<8x1xf32> to vector<8x8xf32>
    %120 = arith.mulf %115, %119 : vector<8x8xf32>
    %121 = arith.truncf %120 : vector<8x8xf32> to vector<8x8xbf16>
    %cst_33 = arith.constant dense<0.000000e+00> : vector<8x16xf32>
    %122 = tpu.matmul %121, %108, %cst_33 {dimension_numbers = #tpu.dot_dimension_numbers<[1], [0], [0], [1], [0, 0, 1, 1], [], []>} : vector<8x8xbf16>, vector<8x16xbf16>, vector<8x16xf32> -> vector<8x16xf32>
    %123 = vector.extract_strided_slice %105 {offsets = [0, 16], sizes = [8, 16], strides = [1, 1]} : vector<8x192xbf16> to vector<8x16xbf16>
    %124 = vector.extract_strided_slice %105 {offsets = [0, 80], sizes = [8, 16], strides = [1, 1]} : vector<8x192xbf16> to vector<8x16xbf16>
    %125 = vector.extract_strided_slice %105 {offsets = [0, 144], sizes = [8, 16], strides = [1, 1]} : vector<8x192xbf16> to vector<8x16xbf16>
    %cst_34 = arith.constant dense<0.000000e+00> : vector<8x8xf32>
    %126 = tpu.matmul %123, %124, %cst_34 {dimension_numbers = #tpu.dot_dimension_numbers<[1], [1], [0], [0], [0, 0, 1, 0], [], []>} : vector<8x16xbf16>, vector<8x16xbf16>, vector<8x8xf32> -> vector<8x8xf32>
    %127 = arith.addf %126, %6 : vector<8x8xf32>
    %cst_35 = arith.constant dense<0xFF800000> : vector<8xf32>
    %128 = vector.multi_reduction <maximumf>, %127, %cst_35 [1] : vector<8x8xf32> to vector<8xf32>
    %129 = vector.shape_cast %128 : vector<8xf32> to vector<8x1xf32>
    %130 = vector.broadcast %129 : vector<8x1xf32> to vector<8x8xf32>
    %131 = arith.subf %127, %130 : vector<8x8xf32>
    %132 = math.exp %131 : vector<8x8xf32>
    %cst_36 = arith.constant dense<0.000000e+00> : vector<8xf32>
    %133 = vector.multi_reduction <add>, %132, %cst_36 [1] : vector<8x8xf32> to vector<8xf32>
    %134 = vector.shape_cast %133 : vector<8xf32> to vector<8x1xf32>
    %135 = tpu.reciprocal %134 {approx = true} : vector<8x1xf32> -> vector<8x1xf32>
    %136 = vector.broadcast %135 : vector<8x1xf32> to vector<8x8xf32>
    %137 = arith.mulf %132, %136 : vector<8x8xf32>
    %138 = arith.truncf %137 : vector<8x8xf32> to vector<8x8xbf16>
    %cst_37 = arith.constant dense<0.000000e+00> : vector<8x16xf32>
    %139 = tpu.matmul %138, %125, %cst_37 {dimension_numbers = #tpu.dot_dimension_numbers<[1], [0], [0], [1], [0, 0, 1, 1], [], []>} : vector<8x8xbf16>, vector<8x16xbf16>, vector<8x16xf32> -> vector<8x16xf32>
    %140 = vector.extract_strided_slice %105 {offsets = [0, 32], sizes = [8, 16], strides = [1, 1]} : vector<8x192xbf16> to vector<8x16xbf16>
    %141 = vector.extract_strided_slice %105 {offsets = [0, 96], sizes = [8, 16], strides = [1, 1]} : vector<8x192xbf16> to vector<8x16xbf16>
    %142 = vector.extract_strided_slice %105 {offsets = [0, 160], sizes = [8, 16], strides = [1, 1]} : vector<8x192xbf16> to vector<8x16xbf16>
    %cst_38 = arith.constant dense<0.000000e+00> : vector<8x8xf32>
    %143 = tpu.matmul %140, %141, %cst_38 {dimension_numbers = #tpu.dot_dimension_numbers<[1], [1], [0], [0], [0, 0, 1, 0], [], []>} : vector<8x16xbf16>, vector<8x16xbf16>, vector<8x8xf32> -> vector<8x8xf32>
    %144 = arith.addf %143, %6 : vector<8x8xf32>
    %cst_39 = arith.constant dense<0xFF800000> : vector<8xf32>
    %145 = vector.multi_reduction <maximumf>, %144, %cst_39 [1] : vector<8x8xf32> to vector<8xf32>
    %146 = vector.shape_cast %145 : vector<8xf32> to vector<8x1xf32>
    %147 = vector.broadcast %146 : vector<8x1xf32> to vector<8x8xf32>
    %148 = arith.subf %144, %147 : vector<8x8xf32>
    %149 = math.exp %148 : vector<8x8xf32>
    %cst_40 = arith.constant dense<0.000000e+00> : vector<8xf32>
    %150 = vector.multi_reduction <add>, %149, %cst_40 [1] : vector<8x8xf32> to vector<8xf32>
    %151 = vector.shape_cast %150 : vector<8xf32> to vector<8x1xf32>
    %152 = tpu.reciprocal %151 {approx = true} : vector<8x1xf32> -> vector<8x1xf32>
    %153 = vector.broadcast %152 : vector<8x1xf32> to vector<8x8xf32>
    %154 = arith.mulf %149, %153 : vector<8x8xf32>
    %155 = arith.truncf %154 : vector<8x8xf32> to vector<8x8xbf16>
    %cst_41 = arith.constant dense<0.000000e+00> : vector<8x16xf32>
    %156 = tpu.matmul %155, %142, %cst_41 {dimension_numbers = #tpu.dot_dimension_numbers<[1], [0], [0], [1], [0, 0, 1, 1], [], []>} : vector<8x8xbf16>, vector<8x16xbf16>, vector<8x16xf32> -> vector<8x16xf32>
    %157 = vector.extract_strided_slice %105 {offsets = [0, 48], sizes = [8, 16], strides = [1, 1]} : vector<8x192xbf16> to vector<8x16xbf16>
    %158 = vector.extract_strided_slice %105 {offsets = [0, 112], sizes = [8, 16], strides = [1, 1]} : vector<8x192xbf16> to vector<8x16xbf16>
    %159 = vector.extract_strided_slice %105 {offsets = [0, 176], sizes = [8, 16], strides = [1, 1]} : vector<8x192xbf16> to vector<8x16xbf16>
    %cst_42 = arith.constant dense<0.000000e+00> : vector<8x8xf32>
    %160 = tpu.matmul %157, %158, %cst_42 {dimension_numbers = #tpu.dot_dimension_numbers<[1], [1], [0], [0], [0, 0, 1, 0], [], []>} : vector<8x16xbf16>, vector<8x16xbf16>, vector<8x8xf32> -> vector<8x8xf32>
    %161 = arith.addf %160, %6 : vector<8x8xf32>
    %cst_43 = arith.constant dense<0xFF800000> : vector<8xf32>
    %162 = vector.multi_reduction <maximumf>, %161, %cst_43 [1] : vector<8x8xf32> to vector<8xf32>
    %163 = vector.shape_cast %162 : vector<8xf32> to vector<8x1xf32>
    %164 = vector.broadcast %163 : vector<8x1xf32> to vector<8x8xf32>
    %165 = arith.subf %161, %164 : vector<8x8xf32>
    %166 = math.exp %165 : vector<8x8xf32>
    %cst_44 = arith.constant dense<0.000000e+00> : vector<8xf32>
    %167 = vector.multi_reduction <add>, %166, %cst_44 [1] : vector<8x8xf32> to vector<8xf32>
    %168 = vector.shape_cast %167 : vector<8xf32> to vector<8x1xf32>
    %169 = tpu.reciprocal %168 {approx = true} : vector<8x1xf32> -> vector<8x1xf32>
    %170 = vector.broadcast %169 : vector<8x1xf32> to vector<8x8xf32>
    %171 = arith.mulf %166, %170 : vector<8x8xf32>
    %172 = arith.truncf %171 : vector<8x8xf32> to vector<8x8xbf16>
    %cst_45 = arith.constant dense<0.000000e+00> : vector<8x16xf32>
    %173 = tpu.matmul %172, %159, %cst_45 {dimension_numbers = #tpu.dot_dimension_numbers<[1], [0], [0], [1], [0, 0, 1, 1], [], []>} : vector<8x8xbf16>, vector<8x16xbf16>, vector<8x16xf32> -> vector<8x16xf32>
    %174 = tpu.concatenate %122, %139, %156, %173 in 1 : vector<8x16xf32>, vector<8x16xf32>, vector<8x16xf32>, vector<8x16xf32> -> vector<8x64xf32>
    %175 = tpu.concatenate %103, %174 in 0 : vector<8x64xf32>, vector<8x64xf32> -> vector<16x64xf32>
    %c0_46 = arith.constant 0 : index
    %c0_47 = arith.constant 0 : index
    %c0_48 = arith.constant 0 : index
    %176 = vector.load %arg4[%c0_46, %c0_47, %c0_48] : memref<2x64x64xbf16, #tpu.memory_space<vmem>>, vector<1x64x64xbf16>
    %177 = vector.shape_cast %176 : vector<1x64x64xbf16> to vector<64x64xbf16>
    %178 = arith.truncf %175 : vector<16x64xf32> to vector<16x64xbf16>
    %cst_49 = arith.constant dense<0.000000e+00> : vector<16x64xf32>
    %179 = tpu.matmul %178, %177, %cst_49 {dimension_numbers = #tpu.dot_dimension_numbers<[1], [0], [0], [1], [0, 0, 1, 1], [], []>} : vector<16x64xbf16>, vector<64x64xbf16>, vector<16x64xf32> -> vector<16x64xf32>
    %c0_50 = arith.constant 0 : index
    %c0_51 = arith.constant 0 : index
    %c0_52 = arith.constant 0 : index
    %180 = vector.load %arg5[%c0_50, %c0_51, %c0_52] : memref<2x1x64xf32, #tpu.memory_space<vmem>>, vector<1x1x64xf32>
    %181 = vector.shape_cast %180 : vector<1x1x64xf32> to vector<1x64xf32>
    %182 = vector.broadcast %181 : vector<1x64xf32> to vector<16x64xf32>
    %183 = arith.addf %179, %182 : vector<16x64xf32>
    %184 = arith.addf %0, %183 : vector<16x64xf32>
    %cst_53 = arith.constant dense<0.000000e+00> : vector<16xf32>
    %185 = vector.multi_reduction <add>, %184, %cst_53 [1] : vector<16x64xf32> to vector<16xf32>
    %186 = vector.shape_cast %185 : vector<16xf32> to vector<16x1xf32>
    %cst_54 = arith.constant 6.400000e+01 : f32
    %187 = vector.broadcast %cst_54 : f32 to vector<16x1xf32>
    %188 = arith.divf %186, %187 : vector<16x1xf32>
    %189 = vector.broadcast %188 : vector<16x1xf32> to vector<16x64xf32>
    %190 = arith.subf %184, %189 : vector<16x64xf32>
    %191 = arith.mulf %190, %190 : vector<16x64xf32>
    %cst_55 = arith.constant dense<0.000000e+00> : vector<16xf32>
    %192 = vector.multi_reduction <add>, %191, %cst_55 [1] : vector<16x64xf32> to vector<16xf32>
    %193 = vector.shape_cast %192 : vector<16xf32> to vector<16x1xf32>
    %cst_56 = arith.constant 6.400000e+01 : f32
    %194 = vector.broadcast %cst_56 : f32 to vector<16x1xf32>
    %195 = arith.divf %193, %194 : vector<16x1xf32>
    %196 = vector.broadcast %188 : vector<16x1xf32> to vector<16x64xf32>
    %197 = arith.subf %184, %196 : vector<16x64xf32>
    %cst_57 = arith.constant 9.99999974E-6 : f32
    %198 = vector.broadcast %cst_57 : f32 to vector<16x1xf32>
    %199 = arith.addf %195, %198 : vector<16x1xf32>
    %200 = math.rsqrt %199 : vector<16x1xf32>
    %201 = vector.broadcast %200 : vector<16x1xf32> to vector<16x64xf32>
    %202 = arith.mulf %197, %201 : vector<16x64xf32>
    %c0_58 = arith.constant 0 : index
    %c0_59 = arith.constant 0 : index
    %c0_60 = arith.constant 0 : index
    %203 = vector.load %arg6[%c0_58, %c0_59, %c0_60] : memref<2x64x256xbf16, #tpu.memory_space<vmem>>, vector<1x64x256xbf16>
    %204 = vector.shape_cast %203 : vector<1x64x256xbf16> to vector<64x256xbf16>
    %205 = arith.truncf %202 : vector<16x64xf32> to vector<16x64xbf16>
    %cst_61 = arith.constant dense<0.000000e+00> : vector<16x256xf32>
    %206 = tpu.matmul %205, %204, %cst_61 {dimension_numbers = #tpu.dot_dimension_numbers<[1], [0], [0], [1], [0, 0, 1, 1], [], []>} : vector<16x64xbf16>, vector<64x256xbf16>, vector<16x256xf32> -> vector<16x256xf32>
    %c0_62 = arith.constant 0 : index
    %c0_63 = arith.constant 0 : index
    %c0_64 = arith.constant 0 : index
    %207 = vector.load %arg7[%c0_62, %c0_63, %c0_64] : memref<2x1x256xf32, #tpu.memory_space<vmem>>, vector<1x1x256xf32>
    %208 = vector.shape_cast %207 : vector<1x1x256xf32> to vector<1x256xf32>
    %209 = vector.broadcast %208 : vector<1x256xf32> to vector<16x256xf32>
    %210 = arith.addf %206, %209 : vector<16x256xf32>
    %211 = arith.mulf %210, %210 : vector<16x256xf32>
    %212 = arith.mulf %210, %211 : vector<16x256xf32>
    %cst_65 = arith.constant 4.471500e-02 : f32
    %213 = vector.broadcast %cst_65 : f32 to vector<16x256xf32>
    %214 = arith.mulf %213, %212 : vector<16x256xf32>
    %215 = arith.addf %210, %214 : vector<16x256xf32>
    %cst_66 = arith.constant 0.797884583 : f32
    %216 = vector.broadcast %cst_66 : f32 to vector<16x256xf32>
    %217 = arith.mulf %216, %215 : vector<16x256xf32>
    %218 = math.tanh %217 : vector<16x256xf32>
    %cst_67 = arith.constant 1.000000e+00 : f32
    %219 = vector.broadcast %cst_67 : f32 to vector<16x256xf32>
    %220 = arith.addf %219, %218 : vector<16x256xf32>
    %cst_68 = arith.constant 5.000000e-01 : f32
    %221 = vector.broadcast %cst_68 : f32 to vector<16x256xf32>
    %222 = arith.mulf %221, %220 : vector<16x256xf32>
    %223 = arith.mulf %210, %222 : vector<16x256xf32>
    %c0_69 = arith.constant 0 : index
    %c0_70 = arith.constant 0 : index
    %c0_71 = arith.constant 0 : index
    %224 = vector.load %arg8[%c0_69, %c0_70, %c0_71] : memref<2x256x64xbf16, #tpu.memory_space<vmem>>, vector<1x256x64xbf16>
    %225 = vector.shape_cast %224 : vector<1x256x64xbf16> to vector<256x64xbf16>
    %226 = arith.truncf %223 : vector<16x256xf32> to vector<16x256xbf16>
    %cst_72 = arith.constant dense<0.000000e+00> : vector<16x64xf32>
    %227 = tpu.matmul %226, %225, %cst_72 {dimension_numbers = #tpu.dot_dimension_numbers<[1], [0], [0], [1], [0, 0, 1, 1], [], []>} : vector<16x256xbf16>, vector<256x64xbf16>, vector<16x64xf32> -> vector<16x64xf32>
    %c0_73 = arith.constant 0 : index
    %c0_74 = arith.constant 0 : index
    %c0_75 = arith.constant 0 : index
    %228 = vector.load %arg9[%c0_73, %c0_74, %c0_75] : memref<2x1x64xf32, #tpu.memory_space<vmem>>, vector<1x1x64xf32>
    %229 = vector.shape_cast %228 : vector<1x1x64xf32> to vector<1x64xf32>
    %230 = vector.broadcast %229 : vector<1x64xf32> to vector<16x64xf32>
    %231 = arith.addf %227, %230 : vector<16x64xf32>
    %232 = arith.addf %184, %231 : vector<16x64xf32>
    %cst_76 = arith.constant dense<0.000000e+00> : vector<16xf32>
    %233 = vector.multi_reduction <add>, %232, %cst_76 [1] : vector<16x64xf32> to vector<16xf32>
    %234 = vector.shape_cast %233 : vector<16xf32> to vector<16x1xf32>
    %cst_77 = arith.constant 6.400000e+01 : f32
    %235 = vector.broadcast %cst_77 : f32 to vector<16x1xf32>
    %236 = arith.divf %234, %235 : vector<16x1xf32>
    %237 = vector.broadcast %236 : vector<16x1xf32> to vector<16x64xf32>
    %238 = arith.subf %232, %237 : vector<16x64xf32>
    %239 = arith.mulf %238, %238 : vector<16x64xf32>
    %cst_78 = arith.constant dense<0.000000e+00> : vector<16xf32>
    %240 = vector.multi_reduction <add>, %239, %cst_78 [1] : vector<16x64xf32> to vector<16xf32>
    %241 = vector.shape_cast %240 : vector<16xf32> to vector<16x1xf32>
    %cst_79 = arith.constant 6.400000e+01 : f32
    %242 = vector.broadcast %cst_79 : f32 to vector<16x1xf32>
    %243 = arith.divf %241, %242 : vector<16x1xf32>
    %244 = vector.broadcast %236 : vector<16x1xf32> to vector<16x64xf32>
    %245 = arith.subf %232, %244 : vector<16x64xf32>
    %cst_80 = arith.constant 9.99999974E-6 : f32
    %246 = vector.broadcast %cst_80 : f32 to vector<16x1xf32>
    %247 = arith.addf %243, %246 : vector<16x1xf32>
    %248 = math.rsqrt %247 : vector<16x1xf32>
    %249 = vector.broadcast %248 : vector<16x1xf32> to vector<16x64xf32>
    %250 = arith.mulf %245, %249 : vector<16x64xf32>
    %c1 = arith.constant 1 : index
    %c0_81 = arith.constant 0 : index
    %c0_82 = arith.constant 0 : index
    %251 = vector.load %arg2[%c1, %c0_81, %c0_82] : memref<2x64x192xbf16, #tpu.memory_space<vmem>>, vector<1x64x192xbf16>
    %252 = vector.shape_cast %251 : vector<1x64x192xbf16> to vector<64x192xbf16>
    %253 = arith.truncf %250 : vector<16x64xf32> to vector<16x64xbf16>
    %cst_83 = arith.constant dense<0.000000e+00> : vector<16x192xf32>
    %254 = tpu.matmul %253, %252, %cst_83 {dimension_numbers = #tpu.dot_dimension_numbers<[1], [0], [0], [1], [0, 0, 1, 1], [], []>} : vector<16x64xbf16>, vector<64x192xbf16>, vector<16x192xf32> -> vector<16x192xf32>
    %c1_84 = arith.constant 1 : index
    %c0_85 = arith.constant 0 : index
    %c0_86 = arith.constant 0 : index
    %255 = vector.load %arg3[%c1_84, %c0_85, %c0_86] : memref<2x1x192xf32, #tpu.memory_space<vmem>>, vector<1x1x192xf32>
    %256 = vector.shape_cast %255 : vector<1x1x192xf32> to vector<1x192xf32>
    %257 = vector.broadcast %256 : vector<1x192xf32> to vector<16x192xf32>
    %258 = arith.addf %254, %257 : vector<16x192xf32>
    %259 = vector.extract_strided_slice %258 {offsets = [0, 0], sizes = [8, 192], strides = [1, 1]} : vector<16x192xf32> to vector<8x192xf32>
    %260 = arith.truncf %259 : vector<8x192xf32> to vector<8x192xbf16>
    %261 = vector.extract_strided_slice %260 {offsets = [0, 0], sizes = [8, 16], strides = [1, 1]} : vector<8x192xbf16> to vector<8x16xbf16>
    %262 = vector.extract_strided_slice %260 {offsets = [0, 64], sizes = [8, 16], strides = [1, 1]} : vector<8x192xbf16> to vector<8x16xbf16>
    %263 = vector.extract_strided_slice %260 {offsets = [0, 128], sizes = [8, 16], strides = [1, 1]} : vector<8x192xbf16> to vector<8x16xbf16>
    %cst_87 = arith.constant dense<0.000000e+00> : vector<8x8xf32>
    %264 = tpu.matmul %261, %262, %cst_87 {dimension_numbers = #tpu.dot_dimension_numbers<[1], [1], [0], [0], [0, 0, 1, 0], [], []>} : vector<8x16xbf16>, vector<8x16xbf16>, vector<8x8xf32> -> vector<8x8xf32>
    %265 = arith.addf %264, %6 : vector<8x8xf32>
    %cst_88 = arith.constant dense<0xFF800000> : vector<8xf32>
    %266 = vector.multi_reduction <maximumf>, %265, %cst_88 [1] : vector<8x8xf32> to vector<8xf32>
    %267 = vector.shape_cast %266 : vector<8xf32> to vector<8x1xf32>
    %268 = vector.broadcast %267 : vector<8x1xf32> to vector<8x8xf32>
    %269 = arith.subf %265, %268 : vector<8x8xf32>
    %270 = math.exp %269 : vector<8x8xf32>
    %cst_89 = arith.constant dense<0.000000e+00> : vector<8xf32>
    %271 = vector.multi_reduction <add>, %270, %cst_89 [1] : vector<8x8xf32> to vector<8xf32>
    %272 = vector.shape_cast %271 : vector<8xf32> to vector<8x1xf32>
    %273 = tpu.reciprocal %272 {approx = true} : vector<8x1xf32> -> vector<8x1xf32>
    %274 = vector.broadcast %273 : vector<8x1xf32> to vector<8x8xf32>
    %275 = arith.mulf %270, %274 : vector<8x8xf32>
    %276 = arith.truncf %275 : vector<8x8xf32> to vector<8x8xbf16>
    %cst_90 = arith.constant dense<0.000000e+00> : vector<8x16xf32>
    %277 = tpu.matmul %276, %263, %cst_90 {dimension_numbers = #tpu.dot_dimension_numbers<[1], [0], [0], [1], [0, 0, 1, 1], [], []>} : vector<8x8xbf16>, vector<8x16xbf16>, vector<8x16xf32> -> vector<8x16xf32>
    %278 = vector.extract_strided_slice %260 {offsets = [0, 16], sizes = [8, 16], strides = [1, 1]} : vector<8x192xbf16> to vector<8x16xbf16>
    %279 = vector.extract_strided_slice %260 {offsets = [0, 80], sizes = [8, 16], strides = [1, 1]} : vector<8x192xbf16> to vector<8x16xbf16>
    %280 = vector.extract_strided_slice %260 {offsets = [0, 144], sizes = [8, 16], strides = [1, 1]} : vector<8x192xbf16> to vector<8x16xbf16>
    %cst_91 = arith.constant dense<0.000000e+00> : vector<8x8xf32>
    %281 = tpu.matmul %278, %279, %cst_91 {dimension_numbers = #tpu.dot_dimension_numbers<[1], [1], [0], [0], [0, 0, 1, 0], [], []>} : vector<8x16xbf16>, vector<8x16xbf16>, vector<8x8xf32> -> vector<8x8xf32>
    %282 = arith.addf %281, %6 : vector<8x8xf32>
    %cst_92 = arith.constant dense<0xFF800000> : vector<8xf32>
    %283 = vector.multi_reduction <maximumf>, %282, %cst_92 [1] : vector<8x8xf32> to vector<8xf32>
    %284 = vector.shape_cast %283 : vector<8xf32> to vector<8x1xf32>
    %285 = vector.broadcast %284 : vector<8x1xf32> to vector<8x8xf32>
    %286 = arith.subf %282, %285 : vector<8x8xf32>
    %287 = math.exp %286 : vector<8x8xf32>
    %cst_93 = arith.constant dense<0.000000e+00> : vector<8xf32>
    %288 = vector.multi_reduction <add>, %287, %cst_93 [1] : vector<8x8xf32> to vector<8xf32>
    %289 = vector.shape_cast %288 : vector<8xf32> to vector<8x1xf32>
    %290 = tpu.reciprocal %289 {approx = true} : vector<8x1xf32> -> vector<8x1xf32>
    %291 = vector.broadcast %290 : vector<8x1xf32> to vector<8x8xf32>
    %292 = arith.mulf %287, %291 : vector<8x8xf32>
    %293 = arith.truncf %292 : vector<8x8xf32> to vector<8x8xbf16>
    %cst_94 = arith.constant dense<0.000000e+00> : vector<8x16xf32>
    %294 = tpu.matmul %293, %280, %cst_94 {dimension_numbers = #tpu.dot_dimension_numbers<[1], [0], [0], [1], [0, 0, 1, 1], [], []>} : vector<8x8xbf16>, vector<8x16xbf16>, vector<8x16xf32> -> vector<8x16xf32>
    %295 = vector.extract_strided_slice %260 {offsets = [0, 32], sizes = [8, 16], strides = [1, 1]} : vector<8x192xbf16> to vector<8x16xbf16>
    %296 = vector.extract_strided_slice %260 {offsets = [0, 96], sizes = [8, 16], strides = [1, 1]} : vector<8x192xbf16> to vector<8x16xbf16>
    %297 = vector.extract_strided_slice %260 {offsets = [0, 160], sizes = [8, 16], strides = [1, 1]} : vector<8x192xbf16> to vector<8x16xbf16>
    %cst_95 = arith.constant dense<0.000000e+00> : vector<8x8xf32>
    %298 = tpu.matmul %295, %296, %cst_95 {dimension_numbers = #tpu.dot_dimension_numbers<[1], [1], [0], [0], [0, 0, 1, 0], [], []>} : vector<8x16xbf16>, vector<8x16xbf16>, vector<8x8xf32> -> vector<8x8xf32>
    %299 = arith.addf %298, %6 : vector<8x8xf32>
    %cst_96 = arith.constant dense<0xFF800000> : vector<8xf32>
    %300 = vector.multi_reduction <maximumf>, %299, %cst_96 [1] : vector<8x8xf32> to vector<8xf32>
    %301 = vector.shape_cast %300 : vector<8xf32> to vector<8x1xf32>
    %302 = vector.broadcast %301 : vector<8x1xf32> to vector<8x8xf32>
    %303 = arith.subf %299, %302 : vector<8x8xf32>
    %304 = math.exp %303 : vector<8x8xf32>
    %cst_97 = arith.constant dense<0.000000e+00> : vector<8xf32>
    %305 = vector.multi_reduction <add>, %304, %cst_97 [1] : vector<8x8xf32> to vector<8xf32>
    %306 = vector.shape_cast %305 : vector<8xf32> to vector<8x1xf32>
    %307 = tpu.reciprocal %306 {approx = true} : vector<8x1xf32> -> vector<8x1xf32>
    %308 = vector.broadcast %307 : vector<8x1xf32> to vector<8x8xf32>
    %309 = arith.mulf %304, %308 : vector<8x8xf32>
    %310 = arith.truncf %309 : vector<8x8xf32> to vector<8x8xbf16>
    %cst_98 = arith.constant dense<0.000000e+00> : vector<8x16xf32>
    %311 = tpu.matmul %310, %297, %cst_98 {dimension_numbers = #tpu.dot_dimension_numbers<[1], [0], [0], [1], [0, 0, 1, 1], [], []>} : vector<8x8xbf16>, vector<8x16xbf16>, vector<8x16xf32> -> vector<8x16xf32>
    %312 = vector.extract_strided_slice %260 {offsets = [0, 48], sizes = [8, 16], strides = [1, 1]} : vector<8x192xbf16> to vector<8x16xbf16>
    %313 = vector.extract_strided_slice %260 {offsets = [0, 112], sizes = [8, 16], strides = [1, 1]} : vector<8x192xbf16> to vector<8x16xbf16>
    %314 = vector.extract_strided_slice %260 {offsets = [0, 176], sizes = [8, 16], strides = [1, 1]} : vector<8x192xbf16> to vector<8x16xbf16>
    %cst_99 = arith.constant dense<0.000000e+00> : vector<8x8xf32>
    %315 = tpu.matmul %312, %313, %cst_99 {dimension_numbers = #tpu.dot_dimension_numbers<[1], [1], [0], [0], [0, 0, 1, 0], [], []>} : vector<8x16xbf16>, vector<8x16xbf16>, vector<8x8xf32> -> vector<8x8xf32>
    %316 = arith.addf %315, %6 : vector<8x8xf32>
    %cst_100 = arith.constant dense<0xFF800000> : vector<8xf32>
    %317 = vector.multi_reduction <maximumf>, %316, %cst_100 [1] : vector<8x8xf32> to vector<8xf32>
    %318 = vector.shape_cast %317 : vector<8xf32> to vector<8x1xf32>
    %319 = vector.broadcast %318 : vector<8x1xf32> to vector<8x8xf32>
    %320 = arith.subf %316, %319 : vector<8x8xf32>
    %321 = math.exp %320 : vector<8x8xf32>
    %cst_101 = arith.constant dense<0.000000e+00> : vector<8xf32>
    %322 = vector.multi_reduction <add>, %321, %cst_101 [1] : vector<8x8xf32> to vector<8xf32>
    %323 = vector.shape_cast %322 : vector<8xf32> to vector<8x1xf32>
    %324 = tpu.reciprocal %323 {approx = true} : vector<8x1xf32> -> vector<8x1xf32>
    %325 = vector.broadcast %324 : vector<8x1xf32> to vector<8x8xf32>
    %326 = arith.mulf %321, %325 : vector<8x8xf32>
    %327 = arith.truncf %326 : vector<8x8xf32> to vector<8x8xbf16>
    %cst_102 = arith.constant dense<0.000000e+00> : vector<8x16xf32>
    %328 = tpu.matmul %327, %314, %cst_102 {dimension_numbers = #tpu.dot_dimension_numbers<[1], [0], [0], [1], [0, 0, 1, 1], [], []>} : vector<8x8xbf16>, vector<8x16xbf16>, vector<8x16xf32> -> vector<8x16xf32>
    %329 = tpu.concatenate %277, %294, %311, %328 in 1 : vector<8x16xf32>, vector<8x16xf32>, vector<8x16xf32>, vector<8x16xf32> -> vector<8x64xf32>
    %330 = vector.extract_strided_slice %258 {offsets = [8, 0], sizes = [8, 192], strides = [1, 1]} : vector<16x192xf32> to vector<8x192xf32>
    %331 = arith.truncf %330 : vector<8x192xf32> to vector<8x192xbf16>
    %332 = vector.extract_strided_slice %331 {offsets = [0, 0], sizes = [8, 16], strides = [1, 1]} : vector<8x192xbf16> to vector<8x16xbf16>
    %333 = vector.extract_strided_slice %331 {offsets = [0, 64], sizes = [8, 16], strides = [1, 1]} : vector<8x192xbf16> to vector<8x16xbf16>
    %334 = vector.extract_strided_slice %331 {offsets = [0, 128], sizes = [8, 16], strides = [1, 1]} : vector<8x192xbf16> to vector<8x16xbf16>
    %cst_103 = arith.constant dense<0.000000e+00> : vector<8x8xf32>
    %335 = tpu.matmul %332, %333, %cst_103 {dimension_numbers = #tpu.dot_dimension_numbers<[1], [1], [0], [0], [0, 0, 1, 0], [], []>} : vector<8x16xbf16>, vector<8x16xbf16>, vector<8x8xf32> -> vector<8x8xf32>
    %336 = arith.addf %335, %6 : vector<8x8xf32>
    %cst_104 = arith.constant dense<0xFF800000> : vector<8xf32>
    %337 = vector.multi_reduction <maximumf>, %336, %cst_104 [1] : vector<8x8xf32> to vector<8xf32>
    %338 = vector.shape_cast %337 : vector<8xf32> to vector<8x1xf32>
    %339 = vector.broadcast %338 : vector<8x1xf32> to vector<8x8xf32>
    %340 = arith.subf %336, %339 : vector<8x8xf32>
    %341 = math.exp %340 : vector<8x8xf32>
    %cst_105 = arith.constant dense<0.000000e+00> : vector<8xf32>
    %342 = vector.multi_reduction <add>, %341, %cst_105 [1] : vector<8x8xf32> to vector<8xf32>
    %343 = vector.shape_cast %342 : vector<8xf32> to vector<8x1xf32>
    %344 = tpu.reciprocal %343 {approx = true} : vector<8x1xf32> -> vector<8x1xf32>
    %345 = vector.broadcast %344 : vector<8x1xf32> to vector<8x8xf32>
    %346 = arith.mulf %341, %345 : vector<8x8xf32>
    %347 = arith.truncf %346 : vector<8x8xf32> to vector<8x8xbf16>
    %cst_106 = arith.constant dense<0.000000e+00> : vector<8x16xf32>
    %348 = tpu.matmul %347, %334, %cst_106 {dimension_numbers = #tpu.dot_dimension_numbers<[1], [0], [0], [1], [0, 0, 1, 1], [], []>} : vector<8x8xbf16>, vector<8x16xbf16>, vector<8x16xf32> -> vector<8x16xf32>
    %349 = vector.extract_strided_slice %331 {offsets = [0, 16], sizes = [8, 16], strides = [1, 1]} : vector<8x192xbf16> to vector<8x16xbf16>
    %350 = vector.extract_strided_slice %331 {offsets = [0, 80], sizes = [8, 16], strides = [1, 1]} : vector<8x192xbf16> to vector<8x16xbf16>
    %351 = vector.extract_strided_slice %331 {offsets = [0, 144], sizes = [8, 16], strides = [1, 1]} : vector<8x192xbf16> to vector<8x16xbf16>
    %cst_107 = arith.constant dense<0.000000e+00> : vector<8x8xf32>
    %352 = tpu.matmul %349, %350, %cst_107 {dimension_numbers = #tpu.dot_dimension_numbers<[1], [1], [0], [0], [0, 0, 1, 0], [], []>} : vector<8x16xbf16>, vector<8x16xbf16>, vector<8x8xf32> -> vector<8x8xf32>
    %353 = arith.addf %352, %6 : vector<8x8xf32>
    %cst_108 = arith.constant dense<0xFF800000> : vector<8xf32>
    %354 = vector.multi_reduction <maximumf>, %353, %cst_108 [1] : vector<8x8xf32> to vector<8xf32>
    %355 = vector.shape_cast %354 : vector<8xf32> to vector<8x1xf32>
    %356 = vector.broadcast %355 : vector<8x1xf32> to vector<8x8xf32>
    %357 = arith.subf %353, %356 : vector<8x8xf32>
    %358 = math.exp %357 : vector<8x8xf32>
    %cst_109 = arith.constant dense<0.000000e+00> : vector<8xf32>
    %359 = vector.multi_reduction <add>, %358, %cst_109 [1] : vector<8x8xf32> to vector<8xf32>
    %360 = vector.shape_cast %359 : vector<8xf32> to vector<8x1xf32>
    %361 = tpu.reciprocal %360 {approx = true} : vector<8x1xf32> -> vector<8x1xf32>
    %362 = vector.broadcast %361 : vector<8x1xf32> to vector<8x8xf32>
    %363 = arith.mulf %358, %362 : vector<8x8xf32>
    %364 = arith.truncf %363 : vector<8x8xf32> to vector<8x8xbf16>
    %cst_110 = arith.constant dense<0.000000e+00> : vector<8x16xf32>
    %365 = tpu.matmul %364, %351, %cst_110 {dimension_numbers = #tpu.dot_dimension_numbers<[1], [0], [0], [1], [0, 0, 1, 1], [], []>} : vector<8x8xbf16>, vector<8x16xbf16>, vector<8x16xf32> -> vector<8x16xf32>
    %366 = vector.extract_strided_slice %331 {offsets = [0, 32], sizes = [8, 16], strides = [1, 1]} : vector<8x192xbf16> to vector<8x16xbf16>
    %367 = vector.extract_strided_slice %331 {offsets = [0, 96], sizes = [8, 16], strides = [1, 1]} : vector<8x192xbf16> to vector<8x16xbf16>
    %368 = vector.extract_strided_slice %331 {offsets = [0, 160], sizes = [8, 16], strides = [1, 1]} : vector<8x192xbf16> to vector<8x16xbf16>
    %cst_111 = arith.constant dense<0.000000e+00> : vector<8x8xf32>
    %369 = tpu.matmul %366, %367, %cst_111 {dimension_numbers = #tpu.dot_dimension_numbers<[1], [1], [0], [0], [0, 0, 1, 0], [], []>} : vector<8x16xbf16>, vector<8x16xbf16>, vector<8x8xf32> -> vector<8x8xf32>
    %370 = arith.addf %369, %6 : vector<8x8xf32>
    %cst_112 = arith.constant dense<0xFF800000> : vector<8xf32>
    %371 = vector.multi_reduction <maximumf>, %370, %cst_112 [1] : vector<8x8xf32> to vector<8xf32>
    %372 = vector.shape_cast %371 : vector<8xf32> to vector<8x1xf32>
    %373 = vector.broadcast %372 : vector<8x1xf32> to vector<8x8xf32>
    %374 = arith.subf %370, %373 : vector<8x8xf32>
    %375 = math.exp %374 : vector<8x8xf32>
    %cst_113 = arith.constant dense<0.000000e+00> : vector<8xf32>
    %376 = vector.multi_reduction <add>, %375, %cst_113 [1] : vector<8x8xf32> to vector<8xf32>
    %377 = vector.shape_cast %376 : vector<8xf32> to vector<8x1xf32>
    %378 = tpu.reciprocal %377 {approx = true} : vector<8x1xf32> -> vector<8x1xf32>
    %379 = vector.broadcast %378 : vector<8x1xf32> to vector<8x8xf32>
    %380 = arith.mulf %375, %379 : vector<8x8xf32>
    %381 = arith.truncf %380 : vector<8x8xf32> to vector<8x8xbf16>
    %cst_114 = arith.constant dense<0.000000e+00> : vector<8x16xf32>
    %382 = tpu.matmul %381, %368, %cst_114 {dimension_numbers = #tpu.dot_dimension_numbers<[1], [0], [0], [1], [0, 0, 1, 1], [], []>} : vector<8x8xbf16>, vector<8x16xbf16>, vector<8x16xf32> -> vector<8x16xf32>
    %383 = vector.extract_strided_slice %331 {offsets = [0, 48], sizes = [8, 16], strides = [1, 1]} : vector<8x192xbf16> to vector<8x16xbf16>
    %384 = vector.extract_strided_slice %331 {offsets = [0, 112], sizes = [8, 16], strides = [1, 1]} : vector<8x192xbf16> to vector<8x16xbf16>
    %385 = vector.extract_strided_slice %331 {offsets = [0, 176], sizes = [8, 16], strides = [1, 1]} : vector<8x192xbf16> to vector<8x16xbf16>
    %cst_115 = arith.constant dense<0.000000e+00> : vector<8x8xf32>
    %386 = tpu.matmul %383, %384, %cst_115 {dimension_numbers = #tpu.dot_dimension_numbers<[1], [1], [0], [0], [0, 0, 1, 0], [], []>} : vector<8x16xbf16>, vector<8x16xbf16>, vector<8x8xf32> -> vector<8x8xf32>
    %387 = arith.addf %386, %6 : vector<8x8xf32>
    %cst_116 = arith.constant dense<0xFF800000> : vector<8xf32>
    %388 = vector.multi_reduction <maximumf>, %387, %cst_116 [1] : vector<8x8xf32> to vector<8xf32>
    %389 = vector.shape_cast %388 : vector<8xf32> to vector<8x1xf32>
    %390 = vector.broadcast %389 : vector<8x1xf32> to vector<8x8xf32>
    %391 = arith.subf %387, %390 : vector<8x8xf32>
    %392 = math.exp %391 : vector<8x8xf32>
    %cst_117 = arith.constant dense<0.000000e+00> : vector<8xf32>
    %393 = vector.multi_reduction <add>, %392, %cst_117 [1] : vector<8x8xf32> to vector<8xf32>
    %394 = vector.shape_cast %393 : vector<8xf32> to vector<8x1xf32>
    %395 = tpu.reciprocal %394 {approx = true} : vector<8x1xf32> -> vector<8x1xf32>
    %396 = vector.broadcast %395 : vector<8x1xf32> to vector<8x8xf32>
    %397 = arith.mulf %392, %396 : vector<8x8xf32>
    %398 = arith.truncf %397 : vector<8x8xf32> to vector<8x8xbf16>
    %cst_118 = arith.constant dense<0.000000e+00> : vector<8x16xf32>
    %399 = tpu.matmul %398, %385, %cst_118 {dimension_numbers = #tpu.dot_dimension_numbers<[1], [0], [0], [1], [0, 0, 1, 1], [], []>} : vector<8x8xbf16>, vector<8x16xbf16>, vector<8x16xf32> -> vector<8x16xf32>
    %400 = tpu.concatenate %348, %365, %382, %399 in 1 : vector<8x16xf32>, vector<8x16xf32>, vector<8x16xf32>, vector<8x16xf32> -> vector<8x64xf32>
    %401 = tpu.concatenate %329, %400 in 0 : vector<8x64xf32>, vector<8x64xf32> -> vector<16x64xf32>
    %c1_119 = arith.constant 1 : index
    %c0_120 = arith.constant 0 : index
    %c0_121 = arith.constant 0 : index
    %402 = vector.load %arg4[%c1_119, %c0_120, %c0_121] : memref<2x64x64xbf16, #tpu.memory_space<vmem>>, vector<1x64x64xbf16>
    %403 = vector.shape_cast %402 : vector<1x64x64xbf16> to vector<64x64xbf16>
    %404 = arith.truncf %401 : vector<16x64xf32> to vector<16x64xbf16>
    %cst_122 = arith.constant dense<0.000000e+00> : vector<16x64xf32>
    %405 = tpu.matmul %404, %403, %cst_122 {dimension_numbers = #tpu.dot_dimension_numbers<[1], [0], [0], [1], [0, 0, 1, 1], [], []>} : vector<16x64xbf16>, vector<64x64xbf16>, vector<16x64xf32> -> vector<16x64xf32>
    %c1_123 = arith.constant 1 : index
    %c0_124 = arith.constant 0 : index
    %c0_125 = arith.constant 0 : index
    %406 = vector.load %arg5[%c1_123, %c0_124, %c0_125] : memref<2x1x64xf32, #tpu.memory_space<vmem>>, vector<1x1x64xf32>
    %407 = vector.shape_cast %406 : vector<1x1x64xf32> to vector<1x64xf32>
    %408 = vector.broadcast %407 : vector<1x64xf32> to vector<16x64xf32>
    %409 = arith.addf %405, %408 : vector<16x64xf32>
    %410 = arith.addf %232, %409 : vector<16x64xf32>
    %cst_126 = arith.constant dense<0.000000e+00> : vector<16xf32>
    %411 = vector.multi_reduction <add>, %410, %cst_126 [1] : vector<16x64xf32> to vector<16xf32>
    %412 = vector.shape_cast %411 : vector<16xf32> to vector<16x1xf32>
    %cst_127 = arith.constant 6.400000e+01 : f32
    %413 = vector.broadcast %cst_127 : f32 to vector<16x1xf32>
    %414 = arith.divf %412, %413 : vector<16x1xf32>
    %415 = vector.broadcast %414 : vector<16x1xf32> to vector<16x64xf32>
    %416 = arith.subf %410, %415 : vector<16x64xf32>
    %417 = arith.mulf %416, %416 : vector<16x64xf32>
    %cst_128 = arith.constant dense<0.000000e+00> : vector<16xf32>
    %418 = vector.multi_reduction <add>, %417, %cst_128 [1] : vector<16x64xf32> to vector<16xf32>
    %419 = vector.shape_cast %418 : vector<16xf32> to vector<16x1xf32>
    %cst_129 = arith.constant 6.400000e+01 : f32
    %420 = vector.broadcast %cst_129 : f32 to vector<16x1xf32>
    %421 = arith.divf %419, %420 : vector<16x1xf32>
    %422 = vector.broadcast %414 : vector<16x1xf32> to vector<16x64xf32>
    %423 = arith.subf %410, %422 : vector<16x64xf32>
    %cst_130 = arith.constant 9.99999974E-6 : f32
    %424 = vector.broadcast %cst_130 : f32 to vector<16x1xf32>
    %425 = arith.addf %421, %424 : vector<16x1xf32>
    %426 = math.rsqrt %425 : vector<16x1xf32>
    %427 = vector.broadcast %426 : vector<16x1xf32> to vector<16x64xf32>
    %428 = arith.mulf %423, %427 : vector<16x64xf32>
    %c1_131 = arith.constant 1 : index
    %c0_132 = arith.constant 0 : index
    %c0_133 = arith.constant 0 : index
    %429 = vector.load %arg6[%c1_131, %c0_132, %c0_133] : memref<2x64x256xbf16, #tpu.memory_space<vmem>>, vector<1x64x256xbf16>
    %430 = vector.shape_cast %429 : vector<1x64x256xbf16> to vector<64x256xbf16>
    %431 = arith.truncf %428 : vector<16x64xf32> to vector<16x64xbf16>
    %cst_134 = arith.constant dense<0.000000e+00> : vector<16x256xf32>
    %432 = tpu.matmul %431, %430, %cst_134 {dimension_numbers = #tpu.dot_dimension_numbers<[1], [0], [0], [1], [0, 0, 1, 1], [], []>} : vector<16x64xbf16>, vector<64x256xbf16>, vector<16x256xf32> -> vector<16x256xf32>
    %c1_135 = arith.constant 1 : index
    %c0_136 = arith.constant 0 : index
    %c0_137 = arith.constant 0 : index
    %433 = vector.load %arg7[%c1_135, %c0_136, %c0_137] : memref<2x1x256xf32, #tpu.memory_space<vmem>>, vector<1x1x256xf32>
    %434 = vector.shape_cast %433 : vector<1x1x256xf32> to vector<1x256xf32>
    %435 = vector.broadcast %434 : vector<1x256xf32> to vector<16x256xf32>
    %436 = arith.addf %432, %435 : vector<16x256xf32>
    %437 = arith.mulf %436, %436 : vector<16x256xf32>
    %438 = arith.mulf %436, %437 : vector<16x256xf32>
    %cst_138 = arith.constant 4.471500e-02 : f32
    %439 = vector.broadcast %cst_138 : f32 to vector<16x256xf32>
    %440 = arith.mulf %439, %438 : vector<16x256xf32>
    %441 = arith.addf %436, %440 : vector<16x256xf32>
    %cst_139 = arith.constant 0.797884583 : f32
    %442 = vector.broadcast %cst_139 : f32 to vector<16x256xf32>
    %443 = arith.mulf %442, %441 : vector<16x256xf32>
    %444 = math.tanh %443 : vector<16x256xf32>
    %cst_140 = arith.constant 1.000000e+00 : f32
    %445 = vector.broadcast %cst_140 : f32 to vector<16x256xf32>
    %446 = arith.addf %445, %444 : vector<16x256xf32>
    %cst_141 = arith.constant 5.000000e-01 : f32
    %447 = vector.broadcast %cst_141 : f32 to vector<16x256xf32>
    %448 = arith.mulf %447, %446 : vector<16x256xf32>
    %449 = arith.mulf %436, %448 : vector<16x256xf32>
    %c1_142 = arith.constant 1 : index
    %c0_143 = arith.constant 0 : index
    %c0_144 = arith.constant 0 : index
    %450 = vector.load %arg8[%c1_142, %c0_143, %c0_144] : memref<2x256x64xbf16, #tpu.memory_space<vmem>>, vector<1x256x64xbf16>
    %451 = vector.shape_cast %450 : vector<1x256x64xbf16> to vector<256x64xbf16>
    %452 = arith.truncf %449 : vector<16x256xf32> to vector<16x256xbf16>
    %cst_145 = arith.constant dense<0.000000e+00> : vector<16x64xf32>
    %453 = tpu.matmul %452, %451, %cst_145 {dimension_numbers = #tpu.dot_dimension_numbers<[1], [0], [0], [1], [0, 0, 1, 1], [], []>} : vector<16x256xbf16>, vector<256x64xbf16>, vector<16x64xf32> -> vector<16x64xf32>
    %c1_146 = arith.constant 1 : index
    %c0_147 = arith.constant 0 : index
    %c0_148 = arith.constant 0 : index
    %454 = vector.load %arg9[%c1_146, %c0_147, %c0_148] : memref<2x1x64xf32, #tpu.memory_space<vmem>>, vector<1x1x64xf32>
    %455 = vector.shape_cast %454 : vector<1x1x64xf32> to vector<1x64xf32>
    %456 = vector.broadcast %455 : vector<1x64xf32> to vector<16x64xf32>
    %457 = arith.addf %453, %456 : vector<16x64xf32>
    %458 = arith.addf %410, %457 : vector<16x64xf32>
    %459 = vector.extract_strided_slice %458 {offsets = [7, 0], sizes = [1, 64], strides = [1, 1]} : vector<16x64xf32> to vector<1x64xf32>
    %460 = vector.extract_strided_slice %458 {offsets = [15, 0], sizes = [1, 64], strides = [1, 1]} : vector<16x64xf32> to vector<1x64xf32>
    %461 = tpu.concatenate %459, %460 in 0 : vector<1x64xf32>, vector<1x64xf32> -> vector<2x64xf32>
    %cst_149 = arith.constant dense<0.000000e+00> : vector<2xf32>
    %462 = vector.multi_reduction <add>, %461, %cst_149 [1] : vector<2x64xf32> to vector<2xf32>
    %463 = vector.shape_cast %462 : vector<2xf32> to vector<2x1xf32>
    %cst_150 = arith.constant 6.400000e+01 : f32
    %464 = vector.broadcast %cst_150 : f32 to vector<2x1xf32>
    %465 = arith.divf %463, %464 : vector<2x1xf32>
    %466 = vector.broadcast %465 : vector<2x1xf32> to vector<2x64xf32>
    %467 = arith.subf %461, %466 : vector<2x64xf32>
    %468 = arith.mulf %467, %467 : vector<2x64xf32>
    %cst_151 = arith.constant dense<0.000000e+00> : vector<2xf32>
    %469 = vector.multi_reduction <add>, %468, %cst_151 [1] : vector<2x64xf32> to vector<2xf32>
    %470 = vector.shape_cast %469 : vector<2xf32> to vector<2x1xf32>
    %cst_152 = arith.constant 6.400000e+01 : f32
    %471 = vector.broadcast %cst_152 : f32 to vector<2x1xf32>
    %472 = arith.divf %470, %471 : vector<2x1xf32>
    %473 = vector.broadcast %465 : vector<2x1xf32> to vector<2x64xf32>
    %474 = arith.subf %461, %473 : vector<2x64xf32>
    %cst_153 = arith.constant 9.99999974E-6 : f32
    %475 = vector.broadcast %cst_153 : f32 to vector<2x1xf32>
    %476 = arith.addf %472, %475 : vector<2x1xf32>
    %477 = math.rsqrt %476 : vector<2x1xf32>
    %478 = vector.broadcast %477 : vector<2x1xf32> to vector<2x64xf32>
    %479 = arith.mulf %474, %478 : vector<2x64xf32>
    %c0_154 = arith.constant 0 : index
    %c0_155 = arith.constant 0 : index
    %480 = vector.load %arg10[%c0_154, %c0_155] : memref<64x128xbf16, #tpu.memory_space<vmem>>, vector<64x128xbf16>
    %481 = arith.truncf %479 : vector<2x64xf32> to vector<2x64xbf16>
    %cst_156 = arith.constant dense<0.000000e+00> : vector<2x128xf32>
    %482 = tpu.matmul %481, %480, %cst_156 {dimension_numbers = #tpu.dot_dimension_numbers<[1], [0], [0], [1], [0, 0, 1, 1], [], []>} : vector<2x64xbf16>, vector<64x128xbf16>, vector<2x128xf32> -> vector<2x128xf32>
    %c0_157 = arith.constant 0 : index
    %c0_158 = arith.constant 0 : index
    %483 = vector.load %arg11[%c0_157, %c0_158] : memref<1x128xf32, #tpu.memory_space<vmem>>, vector<1x128xf32>
    %484 = vector.broadcast %483 : vector<1x128xf32> to vector<2x128xf32>
    %485 = arith.addf %482, %484 : vector<2x128xf32>
    %cst_159 = arith.constant 0.000000e+00 : f32
    %486 = vector.broadcast %cst_159 : f32 to vector<6x128xf32>
    %487 = tpu.concatenate %485, %486 in 0 : vector<2x128xf32>, vector<6x128xf32> -> vector<8x128xf32>
    %c0_160 = arith.constant 0 : index
    %c0_161 = arith.constant 0 : index
    %488 = vector.load %arg12[%c0_160, %c0_161] : memref<8x128xf32, #tpu.memory_space<vmem>>, vector<8x128xf32>
    tpu.vector_store %arg12[%c0_160, %c0_161], %487 {strides = array<i32>} : memref<8x128xf32, #tpu.memory_space<vmem>>, vector<8x128xf32>,
    return
  }
  func.func @transform_0(%arg0: i32) -> (i32, i32) {
    %c0_i32 = arith.constant 0 : i32
    %c0_i32_0 = arith.constant 0 : i32
    %c0_i32_1 = arith.constant 0 : i32
    return %c0_i32, %c0_i32_0 : i32, i32
  }
  func.func @transform_1(%arg0: i32) -> (i32, i32, i32) {
    %c0_i32 = arith.constant 0 : i32
    %c0_i32_0 = arith.constant 0 : i32
    %c0_i32_1 = arith.constant 0 : i32
    %c0_i32_2 = arith.constant 0 : i32
    return %c0_i32, %c0_i32_0, %c0_i32_1 : i32, i32, i32
  }
  func.func @transform_2(%arg0: i32) -> (i32, i32, i32) {
    %c0_i32 = arith.constant 0 : i32
    %c0_i32_0 = arith.constant 0 : i32
    %c0_i32_1 = arith.constant 0 : i32
    %c0_i32_2 = arith.constant 0 : i32
    return %c0_i32, %c0_i32_0, %c0_i32_1 : i32, i32, i32
  }
  func.func @transform_3(%arg0: i32) -> (i32, i32, i32) {
    %c0_i32 = arith.constant 0 : i32
    %c0_i32_0 = arith.constant 0 : i32
    %c0_i32_1 = arith.constant 0 : i32
    %c0_i32_2 = arith.constant 0 : i32
    return %c0_i32, %c0_i32_0, %c0_i32_1 : i32, i32, i32
  }
  func.func @transform_4(%arg0: i32) -> (i32, i32, i32) {
    %c0_i32 = arith.constant 0 : i32
    %c0_i32_0 = arith.constant 0 : i32
    %c0_i32_1 = arith.constant 0 : i32
    %c0_i32_2 = arith.constant 0 : i32
    return %c0_i32, %c0_i32_0, %c0_i32_1 : i32, i32, i32
  }
  func.func @transform_5(%arg0: i32) -> (i32, i32, i32) {
    %c0_i32 = arith.constant 0 : i32
    %c0_i32_0 = arith.constant 0 : i32
    %c0_i32_1 = arith.constant 0 : i32
    %c0_i32_2 = arith.constant 0 : i32
    return %c0_i32, %c0_i32_0, %c0_i32_1 : i32, i32, i32
  }
  func.func @transform_6(%arg0: i32) -> (i32, i32, i32) {
    %c0_i32 = arith.constant 0 : i32
    %c0_i32_0 = arith.constant 0 : i32
    %c0_i32_1 = arith.constant 0 : i32
    %c0_i32_2 = arith.constant 0 : i32
    return %c0_i32, %c0_i32_0, %c0_i32_1 : i32, i32, i32
  }
  func.func @transform_7(%arg0: i32) -> (i32, i32, i32) {
    %c0_i32 = arith.constant 0 : i32
    %c0_i32_0 = arith.constant 0 : i32
    %c0_i32_1 = arith.constant 0 : i32
    %c0_i32_2 = arith.constant 0 : i32
    return %c0_i32, %c0_i32_0, %c0_i32_1 : i32, i32, i32
  }
  func.func @transform_8(%arg0: i32) -> (i32, i32, i32) {
    %c0_i32 = arith.constant 0 : i32
    %c0_i32_0 = arith.constant 0 : i32
    %c0_i32_1 = arith.constant 0 : i32
    %c0_i32_2 = arith.constant 0 : i32
    return %c0_i32, %c0_i32_0, %c0_i32_1 : i32, i32, i32
  }
  func.func @transform_9(%arg0: i32) -> (i32, i32) {
    %c0_i32 = arith.constant 0 : i32
    %c0_i32_0 = arith.constant 0 : i32
    %c0_i32_1 = arith.constant 0 : i32
    return %c0_i32, %c0_i32_0 : i32, i32
  }
  func.func @transform_10(%arg0: i32) -> (i32, i32) {
    %c0_i32 = arith.constant 0 : i32
    %c0_i32_0 = arith.constant 0 : i32
    %c0_i32_1 = arith.constant 0 : i32
    return %c0_i32, %c0_i32_0 : i32, i32
  }
  func.func @transform_11(%arg0: i32) -> (i32, i32) {
    %c0_i32 = arith.constant 0 : i32
    %c0_i32_0 = arith.constant 0 : i32
    %c0_i32_1 = arith.constant 0 : i32
    return %c0_i32, %c0_i32_0 : i32, i32
  }
}

</mosaic_0001>

<llo_original>
// kernel: gpt2_forward.1
$region0: #{gpt2_forward.1}
  #allocation0 [shape = 'u32[]', space=smem, size = 0x4, offset = 0x4, fixed_abs, tag = 'smem constant byte address 0x4 - core index']
  #allocation1 [shape = 'u32[72,128]{1,0:T(1,128)}', space=vmem, size = 0x9000, scoped, tag = 'internal scratch']
  %s0 = inlined_call_operand.vmem [shape: f32[16,64], index: 0, kind: input, shape index: {}]
  %s1 = inlined_call_operand.vmem [shape: bf16[2,64,192], index: 1, kind: input, shape index: {}]
  %s2 = inlined_call_operand.vmem [shape: f32[2,1,192], index: 2, kind: input, shape index: {}]
  %s3 = inlined_call_operand.vmem [shape: bf16[2,64,64], index: 3, kind: input, shape index: {}]
  %s4 = inlined_call_operand.vmem [shape: f32[2,1,64], index: 4, kind: input, shape index: {}]
  %s5 = inlined_call_operand.vmem [shape: bf16[2,64,256], index: 5, kind: input, shape index: {}]
  %s6 = inlined_call_operand.vmem [shape: f32[2,1,256], index: 6, kind: input, shape index: {}]
  %s7 = inlined_call_operand.vmem [shape: bf16[2,256,64], index: 7, kind: input, shape index: {}]
  %s8 = inlined_call_operand.vmem [shape: f32[2,1,64], index: 8, kind: input, shape index: {}]
  %s9 = inlined_call_operand.vmem [shape: bf16[64,128], index: 9, kind: input, shape index: {}]
  %s10 = inlined_call_operand.vmem [shape: f32[1,128], index: 10, kind: input, shape index: {}]
  %s11 = inlined_call_operand.vmem [shape: f32[8,128], index: 11, kind: output, shape index: {}]
  %s12 = sld [smem:[#allocation0]]
  $region54: #{gpt2_forward.1} parent=0
    _
  %s14 = ssub.s32 1, %s12
  %s15 = scalar_select 0, %s14, %s12
  // Predicated region
  $region2: #{gpt2_forward.1} parent=0 // pred_check
    _
  $region3: #{gpt2_forward.1} parent=0 // pred_check_branch
    %17 = sbr.rel (0) target = $region5
  $region4: #{gpt2_forward.1} parent=0 // pred_region
    _
  $region5: #{gpt2_forward.1} parent=0 // pred_fallthru
    _
  // Predicated region
  $region6: #{gpt2_forward.1} parent=0 // pred_check
    _
  $region7: #{gpt2_forward.1} parent=0 // pred_check_branch
    %19 = sbr.rel (0) target = $region9
  $region8: #{gpt2_forward.1} parent=0 // pred_region
    _
  $region9: #{gpt2_forward.1} parent=0 // pred_fallthru
    _
  // Predicated region
  $region10: #{gpt2_forward.1} parent=0 // pred_check
    _
  $region11: #{gpt2_forward.1} parent=0 // pred_check_branch
    %21 = sbr.rel (0) target = $region13
  $region12: #{gpt2_forward.1} parent=0 // pred_region
    _
  $region13: #{gpt2_forward.1} parent=0 // pred_fallthru
    _
  // Predicated region
  $region14: #{gpt2_forward.1} parent=0 // pred_check
    _
  $region15: #{gpt2_forward.1} parent=0 // pred_check_branch
    %23 = sbr.rel (0) target = $region17
  $region16: #{gpt2_forward.1} parent=0 // pred_region
    _
  $region17: #{gpt2_forward.1} parent=0 // pred_fallthru
    _
  // Predicated region
  $region18: #{gpt2_forward.1} parent=0 // pred_check
    _
  $region19: #{gpt2_forward.1} parent=0 // pred_check_branch
    %25 = sbr.rel (0) target = $region21
  $region20: #{gpt2_forward.1} parent=0 // pred_region
    _
  $region21: #{gpt2_forward.1} parent=0 // pred_fallthru
    _
  // Predicated region
  $region22: #{gpt2_forward.1} parent=0 // pred_check
    _
  $region23: #{gpt2_forward.1} parent=0 // pred_check_branch
    %27 = sbr.rel (0) target = $region25
  $region24: #{gpt2_forward.1} parent=0 // pred_region
    _
  $region25: #{gpt2_forward.1} parent=0 // pred_fallthru
    _
  // Predicated region
  $region26: #{gpt2_forward.1} parent=0 // pred_check
    _
  $region27: #{gpt2_forward.1} parent=0 // pred_check_branch
    %29 = sbr.rel (0) target = $region29
  $region28: #{gpt2_forward.1} parent=0 // pred_region
    _
  $region29: #{gpt2_forward.1} parent=0 // pred_fallthru
    _
  // Predicated region
  $region30: #{gpt2_forward.1} parent=0 // pred_check
    _
  $region31: #{gpt2_forward.1} parent=0 // pred_check_branch
    %31 = sbr.rel (0) target = $region33
  $region32: #{gpt2_forward.1} parent=0 // pred_region
    _
  $region33: #{gpt2_forward.1} parent=0 // pred_fallthru
    _
  // Predicated region
  $region34: #{gpt2_forward.1} parent=0 // pred_check
    _
  $region35: #{gpt2_forward.1} parent=0 // pred_check_branch
    %33 = sbr.rel (0) target = $region37
  $region36: #{gpt2_forward.1} parent=0 // pred_region
    _
  $region37: #{gpt2_forward.1} parent=0 // pred_fallthru
    _
  // Predicated region
  $region38: #{gpt2_forward.1} parent=0 // pred_check
    _
  $region39: #{gpt2_forward.1} parent=0 // pred_check_branch
    %35 = sbr.rel (0) target = $region41
  $region40: #{gpt2_forward.1} parent=0 // pred_region
    _
  $region41: #{gpt2_forward.1} parent=0 // pred_fallthru
    _
  // Predicated region
  $region42: #{gpt2_forward.1} parent=0 // pred_check
    _
  $region43: #{gpt2_forward.1} parent=0 // pred_check_branch
    %37 = sbr.rel (0) target = $region45
  $region44: #{gpt2_forward.1} parent=0 // pred_region
    _
  $region45: #{gpt2_forward.1} parent=0 // pred_fallthru
    _
  %v39 = vld [vmem:[%s0] sm:$0xff]
  %v40 = vld [vmem:[%s0 + $0x8] sm:$0xff]
  %v41 = vlaneseq
  %v42 = vshrl.u32 %v41, 7
  %v43 = vlaneseq
  %v44 = vand.u32 %v43, 127
  %vm45 = vcmp.le.s32.totalorder %v44, %v42
  %v46 = vsel %vm45, 0.0, -1e+30
  %vm47 = vcmask 523264
  %v48 = vsel %vm47, %v39, 0.0
  %49 = vadd.xlane.f32.xlu0 %v48
  %v50 = vpop.xlane.xlu0 %49
  %v51 = vsel %vm47, %v40, 0.0
  %52 = vadd.xlane.f32.xlu0 %v51
  %v53 = vpop.xlane.xlu0 %52
  %v54 = vrcp.pop 64.0
  %v55 = vmul.f32 64.0, %v54
  %v56 = vsub.f32 1.0, %v55
  %v57 = vmul.f32 %v54, %v56
  %v58 = vadd.f32 %v54, %v57
  %vm59 = vweird.f32 %v54
  %v60 = vsel %vm59, %v54, %v58
  %v61 = vmul.f32 %v50, %v60
  %v62 = vmul.f32 %v53, %v60
  %v63 = vsub.f32 %v39, %v61
  %v64 = vsub.f32 %v40, %v62
  %v65 = vmul.f32 %v63, %v63
  %v66 = vmul.f32 %v64, %v64
  %v67 = vsel %vm47, %v65, 0.0
  %68 = vadd.xlane.f32.xlu0 %v67
  %v69 = vpop.xlane.xlu0 %68
  %v70 = vsel %vm47, %v66, 0.0
  %71 = vadd.xlane.f32.xlu0 %v70
  %v72 = vpop.xlane.xlu0 %71
  %v73 = vmul.f32 %v69, %v60
  %v74 = vmul.f32 %v72, %v60
  %v75 = vadd.f32 %v73, 1e-05
  %v76 = vadd.f32 %v74, 1e-05
  %v77 = vrsqrt.pop %v75
  %v78 = vmul.f32 %v77, %v75
  %v79 = vmul.f32 %v78, %v77
  %v80 = vmul.f32 0.5, %v79
  %v81 = vsub.f32 1.5, %v80
  %v82 = vmul.f32 %v77, %v81
  %vm83 = vweird.f32 %v75
  %vm84 = vweird.f32 %v77
  %vm85 = vmor %vm83, %vm84
  %v86 = vsel %vm85, %v77, %v82
  %v87 = vrsqrt.pop %v76
  %v88 = vmul.f32 %v87, %v76
  %v89 = vmul.f32 %v88, %v87
  %v90 = vmul.f32 0.5, %v89
  %v91 = vsub.f32 1.5, %v90
  %v92 = vmul.f32 %v87, %v91
  %vm93 = vweird.f32 %v76
  %vm94 = vweird.f32 %v87
  %vm95 = vmor %vm93, %vm94
  %v96 = vsel %vm95, %v87, %v92
  %v97 = vmul.f32 %v63, %v86
  %v98 = vmul.f32 %v64, %v96
  %v99 = vld [vmem:[%s1] sm:$0xff]
  %v100 = vld [vmem:[%s1 + $0x8] sm:$0xff]
  %v101 = vld [vmem:[%s1 + $0x10] sm:$0xff]
  %v102 = vld [vmem:[%s1 + $0x18] sm:$0xff]
  %v103 = vld [vmem:[%s1 + $0x20] sm:$0xff]
  %v104 = vld [vmem:[%s1 + $0x28] sm:$0xff]
  %v105 = vld [vmem:[%s1 + $0x30] sm:$0xff]
  %v106 = vld [vmem:[%s1 + $0x38] sm:$0xff]
  %v107 = vpack.c.bf16 %v98, %v97
  %v108 = vld [vmem:[%s2] sm:$0x3]
  %v110 = vperm.slane %v108, 0
  %v111 = vperm.slane %v108, 1
  %v122 = vunpack.c.l.b16 %v99
  %v123 = vunpack.c.h.b16 %v99
  %v124 = vunpack.c.l.b16 %v100
  %v125 = vunpack.c.h.b16 %v100
  %v126 = vunpack.c.l.b16 %v101
  %v127 = vunpack.c.h.b16 %v101
  %v128 = vunpack.c.l.b16 %v102
  %v129 = vunpack.c.h.b16 %v102
  %v130 = vunpack.c.l.b16 %v103
  %v131 = vunpack.c.h.b16 %v103
  %v132 = vunpack.c.l.b16 %v104
  %v133 = vunpack.c.h.b16 %v104
  %v134 = vunpack.c.l.b16 %v105
  %v135 = vunpack.c.h.b16 %v105
  %v136 = vunpack.c.l.b16 %v106
  %v137 = vunpack.c.h.b16 %v106
  %v138 = vpack.c.b16 %v124, %v122
  %v139 = vpack.c.b16 %v125, %v123
  %v140 = vpack.c.b16 %v128, %v126
  %v141 = vpack.c.b16 %v129, %v127
  %v142 = vpack.c.b16 %v132, %v130
  %v143 = vpack.c.b16 %v133, %v131
  %v144 = vpack.c.b16 %v136, %v134
  %v145 = vpack.c.b16 %v137, %v135
  %v155 = vsel %vm47, %v107, 0
  %157 = vmatpush.bf16.msra.mxu0 0
  %158 = vmatpush.bf16.msra.mxu0 0
  %159 = vmatpush.bf16.msra.mxu0 0
  %160 = vmatpush.bf16.msra.mxu0 0
  %161 = vmatpush.bf16.msra.mxu0 %v144
  %162 = vmatpush.bf16.msra.mxu0 %v142
  %163 = vmatpush.bf16.msra.mxu0 %v140
  %164 = vmatpush.bf16.msra.mxu0 %v138
  %165 = vmatmul.bf16.gmra.mxu0 %v155
  %v166 = vpop.f32.mrf.mxu0
  %v167 = vadd.f32 %v110, %v166
  %v168 = vpop.f32.mrf.mxu0
  %v169 = vadd.f32 %v110, %v168
  %170 = vdwg.mxu0
  %171 = vmatpush.bf16.msra.mxu0 0
  %172 = vmatpush.bf16.msra.mxu0 0
  %173 = vmatpush.bf16.msra.mxu0 0
  %174 = vmatpush.bf16.msra.mxu0 0
  %175 = vmatpush.bf16.msra.mxu0 %v145
  %176 = vmatpush.bf16.msra.mxu0 %v143
  %177 = vmatpush.bf16.msra.mxu0 %v141
  %178 = vmatpush.bf16.msra.mxu0 %v139
  %179 = vmatmul.bf16.gmra.mxu0 %v155
  %v180 = vpop.f32.mrf.mxu0
  %v181 = vadd.f32 %v111, %v180
  %v182 = vpop.f32.mrf.mxu0
  %v183 = vadd.f32 %v111, %v182
  %184 = vdwg.mxu0
  %v185 = vpack.c.bf16 %v181, %v167
  %v187 = vunpack.c.l.b16 %v185
  %v188 = vpack.c.b16 %v187, %v187
  %189 = vrot.lane.b32.xlu0 %v188, 64
  %v190 = vpop.permute.xlu0 %189
  %vm191 = vcmask 130048
  %v193 = vsel %vm191, %v185, 0
  %v196 = vsel %vm191, %v190, 0
  %198 = vmatpush.bf16.xpose.msra.mxu0 0
  %199 = vmatpush.bf16.xpose.msra.mxu0 0
  %200 = vmatpush.bf16.xpose.msra.mxu0 0
  %201 = vmatpush.bf16.xpose.msra.mxu0 0
  %202 = vmatpush.bf16.xpose.msra.mxu0 0
  %203 = vmatpush.bf16.xpose.msra.mxu0 0
  %204 = vmatpush.bf16.xpose.msra.mxu0 0
  %205 = vmatpush.bf16.xpose.msra.mxu0 %v196
  %206 = vmatmul.bf16.gmra.mxu0 %v193
  %v207 = vpop.f32.mrf.mxu0
  %v208 = vadd.f32 %v46, %v207
  %v209 = vpop.f32.mrf.mxu0
  %210 = vdwg.mxu0
  %vm211 = vcmask 64512
  %v212 = vsel %vm211, %v208, -inf
  %213 = vmax.xlane.f32.xlu0 %v212
  %v214 = vpop.xlane.xlu0 %213
  %v215 = vsub.f32 %v208, %v214
  %v216 = vmul.f32 %v215, 1.442695
  %v217 = vpow.pop %v216
  %v218 = vsel %vm211, %v217, 0.0
  %219 = vadd.xlane.f32.xlu0 %v218
  %v220 = vpop.xlane.xlu0 %219
  %v221 = vrcp.pop %v220
  %v222 = vmul.f32 %v217, %v221
  %v223 = vpack.c.bf16 %v222, %v222
  %v224 = vunpack.c.h.b16 %v185
  %v225 = vpack.c.b16 %v224, %v224
  %v227 = vsel %vm211, %v223, 0
  %vm229 = vcmask 1043456
  %v231 = vsel %vm229, %v225, 0
  %233 = vmatpush.bf16.msra.mxu0 0
  %234 = vmatpush.bf16.msra.mxu0 0
  %235 = vmatpush.bf16.msra.mxu0 0
  %236 = vmatpush.bf16.msra.mxu0 0
  %237 = vmatpush.bf16.msra.mxu0 0
  %238 = vmatpush.bf16.msra.mxu0 0
  %239 = vmatpush.bf16.msra.mxu0 0
  %240 = vmatpush.bf16.msra.mxu0 %v231
  %241 = vmatmul.bf16.gmra.mxu0 %v227
  %v242 = vpop.f32.mrf.mxu0
  %v243 = vadd.f32 0.0, %v242
  %v244 = vpop.f32.mrf.mxu0
  %245 = vdwg.mxu0
  %246 = vrot.lane.b32.xlu0 %v188, 112
  %v247 = vpop.permute.xlu0 %246
  %248 = vrot.lane.b32.xlu0 %v188, 48
  %v249 = vpop.permute.xlu0 %248
  %v251 = vsel %vm191, %v247, 0
  %v254 = vsel %vm191, %v249, 0
  %256 = vmatpush.bf16.xpose.msra.mxu0 0
  %257 = vmatpush.bf16.xpose.msra.mxu0 0
  %258 = vmatpush.bf16.xpose.msra.mxu0 0
  %259 = vmatpush.bf16.xpose.msra.mxu0 0
  %260 = vmatpush.bf16.xpose.msra.mxu0 0
  %261 = vmatpush.bf16.xpose.msra.mxu0 0
  %262 = vmatpush.bf16.xpose.msra.mxu0 0
  %263 = vmatpush.bf16.xpose.msra.mxu0 %v254
  %264 = vmatmul.bf16.gmra.mxu0 %v251
  %v265 = vpop.f32.mrf.mxu0
  %v266 = vadd.f32 %v46, %v265
  %v267 = vpop.f32.mrf.mxu0
  %268 = vdwg.mxu0
  %v269 = vsel %vm211, %v266, -inf
  %270 = vmax.xlane.f32.xlu0 %v269
  %v271 = vpop.xlane.xlu0 %270
  %v272 = vsub.f32 %v266, %v271
  %v273 = vmul.f32 %v272, 1.442695
  %v274 = vpow.pop %v273
  %v275 = vsel %vm211, %v274, 0.0
  %276 = vadd.xlane.f32.xlu0 %v275
  %v277 = vpop.xlane.xlu0 %276
  %v278 = vrcp.pop %v277
  %v279 = vmul.f32 %v274, %v278
  %v280 = vpack.c.bf16 %v279, %v279
  %281 = vrot.lane.b32.xlu0 %v225, 112
  %v282 = vpop.permute.xlu0 %281
  %v284 = vsel %vm211, %v280, 0
  %v287 = vsel %vm229, %v282, 0
  %289 = vmatpush.bf16.msra.mxu0 0
  %290 = vmatpush.bf16.msra.mxu0 0
  %291 = vmatpush.bf16.msra.mxu0 0
  %292 = vmatpush.bf16.msra.mxu0 0
  %293 = vmatpush.bf16.msra.mxu0 0
  %294 = vmatpush.bf16.msra.mxu0 0
  %295 = vmatpush.bf16.msra.mxu0 0
  %296 = vmatpush.bf16.msra.mxu0 %v287
  %297 = vmatmul.bf16.gmra.mxu0 %v284
  %v298 = vpop.f32.mrf.mxu0
  %v299 = vadd.f32 0.0, %v298
  %v300 = vpop.f32.mrf.mxu0
  %301 = vdwg.mxu0
  %302 = vrot.lane.b32.xlu0 %v188, 96
  %v303 = vpop.permute.xlu0 %302
  %304 = vrot.lane.b32.xlu0 %v188, 32
  %v305 = vpop.permute.xlu0 %304
  %v307 = vsel %vm191, %v303, 0
  %v310 = vsel %vm191, %v305, 0
  %312 = vmatpush.bf16.xpose.msra.mxu0 0
  %313 = vmatpush.bf16.xpose.msra.mxu0 0
  %314 = vmatpush.bf16.xpose.msra.mxu0 0
  %315 = vmatpush.bf16.xpose.msra.mxu0 0
  %316 = vmatpush.bf16.xpose.msra.mxu0 0
  %317 = vmatpush.bf16.xpose.msra.mxu0 0
  %318 = vmatpush.bf16.xpose.msra.mxu0 0
  %319 = vmatpush.bf16.xpose.msra.mxu0 %v310
  %320 = vmatmul.bf16.gmra.mxu0 %v307
  %v321 = vpop.f32.mrf.mxu0
  %v322 = vadd.f32 %v46, %v321
  %v323 = vpop.f32.mrf.mxu0
  %324 = vdwg.mxu0
  %v325 = vsel %vm211, %v322, -inf
  %326 = vmax.xlane.f32.xlu0 %v325
  %v327 = vpop.xlane.xlu0 %326
  %v328 = vsub.f32 %v322, %v327
  %v329 = vmul.f32 %v328, 1.442695
  %v330 = vpow.pop %v329
  %v331 = vsel %vm211, %v330, 0.0
  %332 = vadd.xlane.f32.xlu0 %v331
  %v333 = vpop.xlane.xlu0 %332
  %v334 = vrcp.pop %v333
  %v335 = vmul.f32 %v330, %v334
  %v336 = vpack.c.bf16 %v335, %v335
  %337 = vrot.lane.b32.xlu0 %v225, 96
  %v338 = vpop.permute.xlu0 %337
  %v340 = vsel %vm211, %v336, 0
  %v343 = vsel %vm229, %v338, 0
  %345 = vmatpush.bf16.msra.mxu0 0
  %346 = vmatpush.bf16.msra.mxu0 0
  %347 = vmatpush.bf16.msra.mxu0 0
  %348 = vmatpush.bf16.msra.mxu0 0
  %349 = vmatpush.bf16.msra.mxu0 0
  %350 = vmatpush.bf16.msra.mxu0 0
  %351 = vmatpush.bf16.msra.mxu0 0
  %352 = vmatpush.bf16.msra.mxu0 %v343
  %353 = vmatmul.bf16.gmra.mxu0 %v340
  %v354 = vpop.f32.mrf.mxu0
  %v355 = vadd.f32 0.0, %v354
  %v356 = vpop.f32.mrf.mxu0
  %357 = vdwg.mxu0
  %358 = vrot.lane.b32.xlu0 %v188, 80
  %v359 = vpop.permute.xlu0 %358
  %360 = vrot.lane.b32.xlu0 %v188, 16
  %v361 = vpop.permute.xlu0 %360
  %v363 = vsel %vm191, %v359, 0
  %v366 = vsel %vm191, %v361, 0
  %368 = vmatpush.bf16.xpose.msra.mxu0 0
  %369 = vmatpush.bf16.xpose.msra.mxu0 0
  %370 = vmatpush.bf16.xpose.msra.mxu0 0
  %371 = vmatpush.bf16.xpose.msra.mxu0 0
  %372 = vmatpush.bf16.xpose.msra.mxu0 0
  %373 = vmatpush.bf16.xpose.msra.mxu0 0
  %374 = vmatpush.bf16.xpose.msra.mxu0 0
  %375 = vmatpush.bf16.xpose.msra.mxu0 %v366
  %376 = vmatmul.bf16.gmra.mxu0 %v363
  %v377 = vpop.f32.mrf.mxu0
  %v378 = vadd.f32 %v46, %v377
  %v379 = vpop.f32.mrf.mxu0
  %380 = vdwg.mxu0
  %v381 = vsel %vm211, %v378, -inf
  %382 = vmax.xlane.f32.xlu0 %v381
  %v383 = vpop.xlane.xlu0 %382
  %v384 = vsub.f32 %v378, %v383
  %v385 = vmul.f32 %v384, 1.442695
  %v386 = vpow.pop %v385
  %v387 = vsel %vm211, %v386, 0.0
  %388 = vadd.xlane.f32.xlu0 %v387
  %v389 = vpop.xlane.xlu0 %388
  %v390 = vrcp.pop %v389
  %v391 = vmul.f32 %v386, %v390
  %v392 = vpack.c.bf16 %v391, %v391
  %393 = vrot.lane.b32.xlu0 %v225, 80
  %v394 = vpop.permute.xlu0 %393
  %v396 = vsel %vm211, %v392, 0
  %v399 = vsel %vm229, %v394, 0
  %401 = vmatpush.bf16.msra.mxu0 0
  %402 = vmatpush.bf16.msra.mxu0 0
  %403 = vmatpush.bf16.msra.mxu0 0
  %404 = vmatpush.bf16.msra.mxu0 0
  %405 = vmatpush.bf16.msra.mxu0 0
  %406 = vmatpush.bf16.msra.mxu0 0
  %407 = vmatpush.bf16.msra.mxu0 0
  %408 = vmatpush.bf16.msra.mxu0 %v399
  %409 = vmatmul.bf16.gmra.mxu0 %v396
  %v410 = vpop.f32.mrf.mxu0
  %v411 = vadd.f32 0.0, %v410
  %v412 = vpop.f32.mrf.mxu0
  %413 = vdwg.mxu0
  %415 = vrot.lane.b32.xlu0 %v299, 16
  %v416 = vpop.permute.xlu0 %415
  %419 = vrot.lane.b32.xlu0 %v355, 32
  %v420 = vpop.permute.xlu0 %419
  %423 = vrot.lane.b32.xlu0 %v411, 48
  %v424 = vpop.permute.xlu0 %423
  %v426 = vsel %vm191, %v243, %v416
  %vm427 = vcmask 261120
  %v428 = vsel %vm427, %v426, %v420
  %vm429 = vcmask 392192
  %v430 = vsel %vm429, %v428, %v424
  %v431 = vpack.c.bf16 %v183, %v169
  %v433 = vunpack.c.l.b16 %v431
  %v434 = vpack.c.b16 %v433, %v433
  %435 = vrot.lane.b32.xlu0 %v434, 64
  %v436 = vpop.permute.xlu0 %435
  %v438 = vsel %vm191, %v431, 0
  %v441 = vsel %vm191, %v436, 0
  %443 = vmatpush.bf16.xpose.msra.mxu0 0
  %444 = vmatpush.bf16.xpose.msra.mxu0 0
  %445 = vmatpush.bf16.xpose.msra.mxu0 0
  %446 = vmatpush.bf16.xpose.msra.mxu0 0
  %447 = vmatpush.bf16.xpose.msra.mxu0 0
  %448 = vmatpush.bf16.xpose.msra.mxu0 0
  %449 = vmatpush.bf16.xpose.msra.mxu0 0
  %450 = vmatpush.bf16.xpose.msra.mxu0 %v441
  %451 = vmatmul.bf16.gmra.mxu0 %v438
  %v452 = vpop.f32.mrf.mxu0
  %v453 = vadd.f32 %v46, %v452
  %v454 = vpop.f32.mrf.mxu0
  %455 = vdwg.mxu0
  %v456 = vsel %vm211, %v453, -inf
  %457 = vmax.xlane.f32.xlu0 %v456
  %v458 = vpop.xlane.xlu0 %457
  %v459 = vsub.f32 %v453, %v458
  %v460 = vmul.f32 %v459, 1.442695
  %v461 = vpow.pop %v460
  %v462 = vsel %vm211, %v461, 0.0
  %463 = vadd.xlane.f32.xlu0 %v462
  %v464 = vpop.xlane.xlu0 %463
  %v465 = vrcp.pop %v464
  %v466 = vmul.f32 %v461, %v465
  %v467 = vpack.c.bf16 %v466, %v466
  %v468 = vunpack.c.h.b16 %v431
  %v469 = vpack.c.b16 %v468, %v468
  %v471 = vsel %vm211, %v467, 0
  %v474 = vsel %vm229, %v469, 0
  %476 = vmatpush.bf16.msra.mxu0 0
  %477 = vmatpush.bf16.msra.mxu0 0
  %478 = vmatpush.bf16.msra.mxu0 0
  %479 = vmatpush.bf16.msra.mxu0 0
  %480 = vmatpush.bf16.msra.mxu0 0
  %481 = vmatpush.bf16.msra.mxu0 0
  %482 = vmatpush.bf16.msra.mxu0 0
  %483 = vmatpush.bf16.msra.mxu0 %v474
  %484 = vmatmul.bf16.gmra.mxu0 %v471
  %v485 = vpop.f32.mrf.mxu0
  %v486 = vadd.f32 0.0, %v485
  %v487 = vpop.f32.mrf.mxu0
  %488 = vdwg.mxu0
  %489 = vrot.lane.b32.xlu0 %v434, 112
  %v490 = vpop.permute.xlu0 %489
  %491 = vrot.lane.b32.xlu0 %v434, 48
  %v492 = vpop.permute.xlu0 %491
  %v494 = vsel %vm191, %v490, 0
  %v497 = vsel %vm191, %v492, 0
  %499 = vmatpush.bf16.xpose.msra.mxu0 0
  %500 = vmatpush.bf16.xpose.msra.mxu0 0
  %501 = vmatpush.bf16.xpose.msra.mxu0 0
  %502 = vmatpush.bf16.xpose.msra.mxu0 0
  %503 = vmatpush.bf16.xpose.msra.mxu0 0
  %504 = vmatpush.bf16.xpose.msra.mxu0 0
  %505 = vmatpush.bf16.xpose.msra.mxu0 0
  %506 = vmatpush.bf16.xpose.msra.mxu0 %v497
  %507 = vmatmul.bf16.gmra.mxu0 %v494
  %v508 = vpop.f32.mrf.mxu0
  %v509 = vadd.f32 %v46, %v508
  %v510 = vpop.f32.mrf.mxu0
  %511 = vdwg.mxu0
  %v512 = vsel %vm211, %v509, -inf
  %513 = vmax.xlane.f32.xlu0 %v512
  %v514 = vpop.xlane.xlu0 %513
  %v515 = vsub.f32 %v509, %v514
  %v516 = vmul.f32 %v515, 1.442695
  %v517 = vpow.pop %v516
  %v518 = vsel %vm211, %v517, 0.0
  %519 = vadd.xlane.f32.xlu0 %v518
  %v520 = vpop.xlane.xlu0 %519
  %v521 = vrcp.pop %v520
  %v522 = vmul.f32 %v517, %v521
  %v523 = vpack.c.bf16 %v522, %v522
  %524 = vrot.lane.b32.xlu0 %v469, 112
  %v525 = vpop.permute.xlu0 %524
  %v527 = vsel %vm211, %v523, 0
  %v530 = vsel %vm229, %v525, 0
  %532 = vmatpush.bf16.msra.mxu0 0
  %533 = vmatpush.bf16.msra.mxu0 0
  %534 = vmatpush.bf16.msra.mxu0 0
  %535 = vmatpush.bf16.msra.mxu0 0
  %536 = vmatpush.bf16.msra.mxu0 0
  %537 = vmatpush.bf16.msra.mxu0 0
  %538 = vmatpush.bf16.msra.mxu0 0
  %539 = vmatpush.bf16.msra.mxu0 %v530
  %540 = vmatmul.bf16.gmra.mxu0 %v527
  %v541 = vpop.f32.mrf.mxu0
  %v542 = vadd.f32 0.0, %v541
  %v543 = vpop.f32.mrf.mxu0
  %544 = vdwg.mxu0
  %545 = vrot.lane.b32.xlu0 %v434, 96
  %v546 = vpop.permute.xlu0 %545
  %547 = vrot.lane.b32.xlu0 %v434, 32
  %v548 = vpop.permute.xlu0 %547
  %v550 = vsel %vm191, %v546, 0
  %v553 = vsel %vm191, %v548, 0
  %555 = vmatpush.bf16.xpose.msra.mxu0 0
  %556 = vmatpush.bf16.xpose.msra.mxu0 0
  %557 = vmatpush.bf16.xpose.msra.mxu0 0
  %558 = vmatpush.bf16.xpose.msra.mxu0 0
  %559 = vmatpush.bf16.xpose.msra.mxu0 0
  %560 = vmatpush.bf16.xpose.msra.mxu0 0
  %561 = vmatpush.bf16.xpose.msra.mxu0 0
  %562 = vmatpush.bf16.xpose.msra.mxu0 %v553
  %563 = vmatmul.bf16.gmra.mxu0 %v550
  %v564 = vpop.f32.mrf.mxu0
  %v565 = vadd.f32 %v46, %v564
  %v566 = vpop.f32.mrf.mxu0
  %567 = vdwg.mxu0
  %v568 = vsel %vm211, %v565, -inf
  %569 = vmax.xlane.f32.xlu0 %v568
  %v570 = vpop.xlane.xlu0 %569
  %v571 = vsub.f32 %v565, %v570
  %v572 = vmul.f32 %v571, 1.442695
  %v573 = vpow.pop %v572
  %v574 = vsel %vm211, %v573, 0.0
  %575 = vadd.xlane.f32.xlu0 %v574
  %v576 = vpop.xlane.xlu0 %575
  %v577 = vrcp.pop %v576
  %v578 = vmul.f32 %v573, %v577
  %v579 = vpack.c.bf16 %v578, %v578
  %580 = vrot.lane.b32.xlu0 %v469, 96
  %v581 = vpop.permute.xlu0 %580
  %v583 = vsel %vm211, %v579, 0
  %v586 = vsel %vm229, %v581, 0
  %588 = vmatpush.bf16.msra.mxu0 0
  %589 = vmatpush.bf16.msra.mxu0 0
  %590 = vmatpush.bf16.msra.mxu0 0
  %591 = vmatpush.bf16.msra.mxu0 0
  %592 = vmatpush.bf16.msra.mxu0 0
  %593 = vmatpush.bf16.msra.mxu0 0
  %594 = vmatpush.bf16.msra.mxu0 0
  %595 = vmatpush.bf16.msra.mxu0 %v586
  %596 = vmatmul.bf16.gmra.mxu0 %v583
  %v597 = vpop.f32.mrf.mxu0
  %v598 = vadd.f32 0.0, %v597
  %v599 = vpop.f32.mrf.mxu0
  %600 = vdwg.mxu0
  %601 = vrot.lane.b32.xlu0 %v434, 80
  %v602 = vpop.permute.xlu0 %601
  %603 = vrot.lane.b32.xlu0 %v434, 16
  %v604 = vpop.permute.xlu0 %603
  %v606 = vsel %vm191, %v602, 0
  %v609 = vsel %vm191, %v604, 0
  %611 = vmatpush.bf16.xpose.msra.mxu0 0
  %612 = vmatpush.bf16.xpose.msra.mxu0 0
  %613 = vmatpush.bf16.xpose.msra.mxu0 0
  %614 = vmatpush.bf16.xpose.msra.mxu0 0
  %615 = vmatpush.bf16.xpose.msra.mxu0 0
  %616 = vmatpush.bf16.xpose.msra.mxu0 0
  %617 = vmatpush.bf16.xpose.msra.mxu0 0
  %618 = vmatpush.bf16.xpose.msra.mxu0 %v609
  %619 = vmatmul.bf16.gmra.mxu0 %v606
  %v620 = vpop.f32.mrf.mxu0
  %v621 = vadd.f32 %v46, %v620
  %v622 = vpop.f32.mrf.mxu0
  %623 = vdwg.mxu0
  %v624 = vsel %vm211, %v621, -inf
  %625 = vmax.xlane.f32.xlu0 %v624
  %v626 = vpop.xlane.xlu0 %625
  %v627 = vsub.f32 %v621, %v626
  %v628 = vmul.f32 %v627, 1.442695
  %v629 = vpow.pop %v628
  %v630 = vsel %vm211, %v629, 0.0
  %631 = vadd.xlane.f32.xlu0 %v630
  %v632 = vpop.xlane.xlu0 %631
  %v633 = vrcp.pop %v632
  %v634 = vmul.f32 %v629, %v633
  %v635 = vpack.c.bf16 %v634, %v634
  %636 = vrot.lane.b32.xlu0 %v469, 80
  %v637 = vpop.permute.xlu0 %636
  %v639 = vsel %vm211, %v635, 0
  %v642 = vsel %vm229, %v637, 0
  %644 = vmatpush.bf16.msra.mxu0 0
  %645 = vmatpush.bf16.msra.mxu0 0
  %646 = vmatpush.bf16.msra.mxu0 0
  %647 = vmatpush.bf16.msra.mxu0 0
  %648 = vmatpush.bf16.msra.mxu0 0
  %649 = vmatpush.bf16.msra.mxu0 0
  %650 = vmatpush.bf16.msra.mxu0 0
  %651 = vmatpush.bf16.msra.mxu0 %v642
  %652 = vmatmul.bf16.gmra.mxu0 %v639
  %v653 = vpop.f32.mrf.mxu0
  %v654 = vadd.f32 0.0, %v653
  %v655 = vpop.f32.mrf.mxu0
  %656 = vdwg.mxu0
  %658 = vrot.lane.b32.xlu0 %v542, 16
  %v659 = vpop.permute.xlu0 %658
  %662 = vrot.lane.b32.xlu0 %v598, 32
  %v663 = vpop.permute.xlu0 %662
  %666 = vrot.lane.b32.xlu0 %v654, 48
  %v667 = vpop.permute.xlu0 %666
  %v669 = vsel %vm191, %v486, %v659
  %v670 = vsel %vm427, %v669, %v663
  %v671 = vsel %vm429, %v670, %v667
  %v672 = vld [vmem:[%s3] sm:$0xf]
  %v673 = vld [vmem:[%s3 + $0x4] sm:$0xf]
  %v674 = vld [vmem:[%s3 + $0x8] sm:$0xf]
  %v675 = vld [vmem:[%s3 + $0xc] sm:$0xf]
  %v676 = vld [vmem:[%s3 + $0x10] sm:$0xf]
  %v677 = vld [vmem:[%s3 + $0x14] sm:$0xf]
  %v678 = vld [vmem:[%s3 + $0x18] sm:$0xf]
  %v679 = vld [vmem:[%s3 + $0x1c] sm:$0xf]
  %v680 = vpack.c.bf16 %v671, %v430
  %v681 = vld [vmem:[%s4] sm:$0x1]
  %v683 = vperm.slane %v681, 0
  %v693 = vunpack.c.l.b16 %v672
  %v694 = vunpack.c.l.b16 %v673
  %v695 = vunpack.c.l.b16 %v674
  %v696 = vunpack.c.l.b16 %v675
  %v697 = vunpack.c.l.b16 %v676
  %v698 = vunpack.c.l.b16 %v677
  %v699 = vunpack.c.l.b16 %v678
  %v700 = vunpack.c.l.b16 %v679
  %v701 = vpack.c.b16 %v694, %v693
  %v702 = vpack.c.b16 %v696, %v695
  %v703 = vpack.c.b16 %v698, %v697
  %v704 = vpack.c.b16 %v700, %v699
  %v710 = vsel %vm47, %v680, 0
  %712 = vmatpush.bf16.msra.mxu0 0
  %713 = vmatpush.bf16.msra.mxu0 0
  %714 = vmatpush.bf16.msra.mxu0 0
  %715 = vmatpush.bf16.msra.mxu0 0
  %716 = vmatpush.bf16.msra.mxu0 %v704
  %717 = vmatpush.bf16.msra.mxu0 %v703
  %718 = vmatpush.bf16.msra.mxu0 %v702
  %719 = vmatpush.bf16.msra.mxu0 %v701
  %720 = vmatmul.bf16.gmra.mxu0 %v710
  %v721 = vpop.f32.mrf.mxu0
  %v722 = vadd.f32 %v683, %v721
  %v723 = vpop.f32.mrf.mxu0
  %v724 = vadd.f32 %v683, %v723
  %725 = vdwg.mxu0
  %v726 = vadd.f32 %v39, %v722
  %v727 = vadd.f32 %v40, %v724
  %v728 = vsel %vm47, %v726, 0.0
  %729 = vadd.xlane.f32.xlu0 %v728
  %v730 = vpop.xlane.xlu0 %729
  %v731 = vsel %vm47, %v727, 0.0
  %732 = vadd.xlane.f32.xlu0 %v731
  %v733 = vpop.xlane.xlu0 %732
  %v734 = vmul.f32 %v730, %v60
  %v735 = vmul.f32 %v733, %v60
  %v736 = vsub.f32 %v726, %v734
  %v737 = vsub.f32 %v727, %v735
  %v738 = vmul.f32 %v736, %v736
  %v739 = vmul.f32 %v737, %v737
  %v740 = vsel %vm47, %v738, 0.0
  %741 = vadd.xlane.f32.xlu0 %v740
  %v742 = vpop.xlane.xlu0 %741
  %v743 = vsel %vm47, %v739, 0.0
  %744 = vadd.xlane.f32.xlu0 %v743
  %v745 = vpop.xlane.xlu0 %744
  %v746 = vmul.f32 %v742, %v60
  %v747 = vmul.f32 %v745, %v60
  %v748 = vadd.f32 %v746, 1e-05
  %v749 = vadd.f32 %v747, 1e-05
  %v750 = vrsqrt.pop %v748
  %v751 = vmul.f32 %v750, %v748
  %v752 = vmul.f32 %v751, %v750
  %v753 = vmul.f32 0.5, %v752
  %v754 = vsub.f32 1.5, %v753
  %v755 = vmul.f32 %v750, %v754
  %vm756 = vweird.f32 %v748
  %vm757 = vweird.f32 %v750
  %vm758 = vmor %vm756, %vm757
  %v759 = vsel %vm758, %v750, %v755
  %v760 = vrsqrt.pop %v749
  %v761 = vmul.f32 %v760, %v749
  %v762 = vmul.f32 %v761, %v760
  %v763 = vmul.f32 0.5, %v762
  %v764 = vsub.f32 1.5, %v763
  %v765 = vmul.f32 %v760, %v764
  %vm766 = vweird.f32 %v749
  %vm767 = vweird.f32 %v760
  %vm768 = vmor %vm766, %vm767
  %v769 = vsel %vm768, %v760, %v765
  %v770 = vmul.f32 %v736, %v759
  %v771 = vmul.f32 %v737, %v769
  %v772 = vld [vmem:[%s5] sm:$0xff]
  %v773 = vld [vmem:[%s5 + $0x8] sm:$0xff]
  %v774 = vld [vmem:[%s5 + $0x10] sm:$0xff]
  %v775 = vld [vmem:[%s5 + $0x18] sm:$0xff]
  %v776 = vld [vmem:[%s5 + $0x20] sm:$0xff]
  %v777 = vld [vmem:[%s5 + $0x28] sm:$0xff]
  %v778 = vld [vmem:[%s5 + $0x30] sm:$0xff]
  %v779 = vld [vmem:[%s5 + $0x38] sm:$0xff]
  %v780 = vpack.c.bf16 %v771, %v770
  %v781 = vld [vmem:[%s6] sm:$0x3]
  %v783 = vperm.slane %v781, 0
  %v784 = vperm.slane %v781, 1
  %v795 = vunpack.c.l.b16 %v772
  %v796 = vunpack.c.h.b16 %v772
  %v797 = vunpack.c.l.b16 %v773
  %v798 = vunpack.c.h.b16 %v773
  %v799 = vunpack.c.l.b16 %v774
  %v800 = vunpack.c.h.b16 %v774
  %v801 = vunpack.c.l.b16 %v775
  %v802 = vunpack.c.h.b16 %v775
  %v803 = vunpack.c.l.b16 %v776
  %v804 = vunpack.c.h.b16 %v776
  %v805 = vunpack.c.l.b16 %v777
  %v806 = vunpack.c.h.b16 %v777
  %v807 = vunpack.c.l.b16 %v778
  %v808 = vunpack.c.h.b16 %v778
  %v809 = vunpack.c.l.b16 %v779
  %v810 = vunpack.c.h.b16 %v779
  %v811 = vpack.c.b16 %v797, %v795
  %v812 = vpack.c.b16 %v798, %v796
  %v813 = vpack.c.b16 %v801, %v799
  %v814 = vpack.c.b16 %v802, %v800
  %v815 = vpack.c.b16 %v805, %v803
  %v816 = vpack.c.b16 %v806, %v804
  %v817 = vpack.c.b16 %v809, %v807
  %v818 = vpack.c.b16 %v810, %v808
  %v828 = vsel %vm47, %v780, 0
  %830 = vmatpush.bf16.msra.mxu0 0
  %831 = vmatpush.bf16.msra.mxu0 0
  %832 = vmatpush.bf16.msra.mxu0 0
  %833 = vmatpush.bf16.msra.mxu0 0
  %834 = vmatpush.bf16.msra.mxu0 %v817
  %835 = vmatpush.bf16.msra.mxu0 %v815
  %836 = vmatpush.bf16.msra.mxu0 %v813
  %837 = vmatpush.bf16.msra.mxu0 %v811
  %838 = vmatmul.bf16.gmra.mxu0 %v828
  %v839 = vpop.f32.mrf.mxu0
  %v840 = vadd.f32 %v783, %v839
  %v841 = vpop.f32.mrf.mxu0
  %v842 = vadd.f32 %v783, %v841
  %843 = vdwg.mxu0
  %844 = vmatpush.bf16.msra.mxu0 0
  %845 = vmatpush.bf16.msra.mxu0 0
  %846 = vmatpush.bf16.msra.mxu0 0
  %847 = vmatpush.bf16.msra.mxu0 0
  %848 = vmatpush.bf16.msra.mxu0 %v818
  %849 = vmatpush.bf16.msra.mxu0 %v816
  %850 = vmatpush.bf16.msra.mxu0 %v814
  %851 = vmatpush.bf16.msra.mxu0 %v812
  %852 = vmatmul.bf16.gmra.mxu0 %v828
  %v853 = vpop.f32.mrf.mxu0
  %v854 = vadd.f32 %v784, %v853
  %v855 = vpop.f32.mrf.mxu0
  %v856 = vadd.f32 %v784, %v855
  %857 = vdwg.mxu0
  %v858 = vmul.f32 %v840, %v840
  %v859 = vmul.f32 %v854, %v854
  %v860 = vmul.f32 %v842, %v842
  %v861 = vmul.f32 %v856, %v856
  %v862 = vmul.f32 %v840, %v858
  %v863 = vmul.f32 %v854, %v859
  %v864 = vmul.f32 %v842, %v860
  %v865 = vmul.f32 %v856, %v861
  %v866 = vmul.f32 %v862, 0.044715
  %v867 = vmul.f32 %v863, 0.044715
  %v868 = vmul.f32 %v864, 0.044715
  %v869 = vmul.f32 %v865, 0.044715
  %v870 = vadd.f32 %v840, %v866
  %v871 = vadd.f32 %v854, %v867
  %v872 = vadd.f32 %v842, %v868
  %v873 = vadd.f32 %v856, %v869
  %v874 = vmul.f32 %v870, 0.7978846
  %v875 = vmul.f32 %v871, 0.7978846
  %v876 = vmul.f32 %v872, 0.7978846
  %v877 = vmul.f32 %v873, 0.7978846
  %v878 = vtanh.pop %v874
  %v879 = vtanh.pop %v875
  %v880 = vtanh.pop %v876
  %v881 = vtanh.pop %v877
  %v882 = vadd.f32 %v878, 1.0
  %v883 = vadd.f32 %v879, 1.0
  %v884 = vadd.f32 %v880, 1.0
  %v885 = vadd.f32 %v881, 1.0
  %v886 = vmul.f32 %v882, 0.5
  %v887 = vmul.f32 %v883, 0.5
  %v888 = vmul.f32 %v884, 0.5
  %v889 = vmul.f32 %v885, 0.5
  %v890 = vmul.f32 %v840, %v886
  %v891 = vmul.f32 %v854, %v887
  %v892 = vmul.f32 %v842, %v888
  %v893 = vmul.f32 %v856, %v889
  %v894 = vld [vmem:[%s7] sm:$0xf]
  %v895 = vld [vmem:[%s7 + $0x4] sm:$0xf]
  %v896 = vld [vmem:[%s7 + $0x8] sm:$0xf]
  %v897 = vld [vmem:[%s7 + $0xc] sm:$0xf]
  %v898 = vld [vmem:[%s7 + $0x10] sm:$0xf]
  %v899 = vld [vmem:[%s7 + $0x14] sm:$0xf]
  %v900 = vld [vmem:[%s7 + $0x18] sm:$0xf]
  %v901 = vld [vmem:[%s7 + $0x1c] sm:$0xf]
  %v902 = vld [vmem:[%s7 + $0x20] sm:$0xf]
  %v903 = vld [vmem:[%s7 + $0x24] sm:$0xf]
  %v904 = vld [vmem:[%s7 + $0x28] sm:$0xf]
  %v905 = vld [vmem:[%s7 + $0x2c] sm:$0xf]
  %v906 = vld [vmem:[%s7 + $0x30] sm:$0xf]
  %v907 = vld [vmem:[%s7 + $0x34] sm:$0xf]
  %v908 = vld [vmem:[%s7 + $0x38] sm:$0xf]
  %v909 = vld [vmem:[%s7 + $0x3c] sm:$0xf]
  %v910 = vld [vmem:[%s7 + $0x40] sm:$0xf]
  %v911 = vld [vmem:[%s7 + $0x44] sm:$0xf]
  %v912 = vld [vmem:[%s7 + $0x48] sm:$0xf]
  %v913 = vld [vmem:[%s7 + $0x4c] sm:$0xf]
  %v914 = vld [vmem:[%s7 + $0x50] sm:$0xf]
  %v915 = vld [vmem:[%s7 + $0x54] sm:$0xf]
  %v916 = vld [vmem:[%s7 + $0x58] sm:$0xf]
  %v917 = vld [vmem:[%s7 + $0x5c] sm:$0xf]
  %v918 = vld [vmem:[%s7 + $0x60] sm:$0xf]
  %v919 = vld [vmem:[%s7 + $0x64] sm:$0xf]
  %v920 = vld [vmem:[%s7 + $0x68] sm:$0xf]
  %v921 = vld [vmem:[%s7 + $0x6c] sm:$0xf]
  %v922 = vld [vmem:[%s7 + $0x70] sm:$0xf]
  %v923 = vld [vmem:[%s7 + $0x74] sm:$0xf]
  %v924 = vld [vmem:[%s7 + $0x78] sm:$0xf]
  %v925 = vld [vmem:[%s7 + $0x7c] sm:$0xf]
  %v926 = vpack.c.bf16 %v892, %v890
  %v927 = vpack.c.bf16 %v893, %v891
  %v928 = vld [vmem:[%s8] sm:$0x1]
  %v930 = vperm.slane %v928, 0
  %v964 = vunpack.c.l.b16 %v894
  %v965 = vunpack.c.l.b16 %v895
  %v966 = vunpack.c.l.b16 %v896
  %v967 = vunpack.c.l.b16 %v897
  %v968 = vunpack.c.l.b16 %v898
  %v969 = vunpack.c.l.b16 %v899
  %v970 = vunpack.c.l.b16 %v900
  %v971 = vunpack.c.l.b16 %v901
  %v972 = vunpack.c.l.b16 %v902
  %v973 = vunpack.c.l.b16 %v903
  %v974 = vunpack.c.l.b16 %v904
  %v975 = vunpack.c.l.b16 %v905
  %v976 = vunpack.c.l.b16 %v906
  %v977 = vunpack.c.l.b16 %v907
  %v978 = vunpack.c.l.b16 %v908
  %v979 = vunpack.c.l.b16 %v909
  %v980 = vunpack.c.l.b16 %v910
  %v981 = vunpack.c.l.b16 %v911
  %v982 = vunpack.c.l.b16 %v912
  %v983 = vunpack.c.l.b16 %v913
  %v984 = vunpack.c.l.b16 %v914
  %v985 = vunpack.c.l.b16 %v915
  %v986 = vunpack.c.l.b16 %v916
  %v987 = vunpack.c.l.b16 %v917
  %v988 = vunpack.c.l.b16 %v918
  %v989 = vunpack.c.l.b16 %v919
  %v990 = vunpack.c.l.b16 %v920
  %v991 = vunpack.c.l.b16 %v921
  %v992 = vunpack.c.l.b16 %v922
  %v993 = vunpack.c.l.b16 %v923
  %v994 = vunpack.c.l.b16 %v924
  %v995 = vunpack.c.l.b16 %v925
  %v996 = vpack.c.b16 %v965, %v964
  %v997 = vpack.c.b16 %v967, %v966
  %v998 = vpack.c.b16 %v969, %v968
  %v999 = vpack.c.b16 %v971, %v970
  %v1000 = vpack.c.b16 %v973, %v972
  %v1001 = vpack.c.b16 %v975, %v974
  %v1002 = vpack.c.b16 %v977, %v976
  %v1003 = vpack.c.b16 %v979, %v978
  %v1004 = vpack.c.b16 %v981, %v980
  %v1005 = vpack.c.b16 %v983, %v982
  %v1006 = vpack.c.b16 %v985, %v984
  %v1007 = vpack.c.b16 %v987, %v986
  %v1008 = vpack.c.b16 %v989, %v988
  %v1009 = vpack.c.b16 %v991, %v990
  %v1010 = vpack.c.b16 %v993, %v992
  %v1011 = vpack.c.b16 %v995, %v994
  %1028 = vmatpush.bf16.msra.mxu0 %v1003
  %1029 = vmatpush.bf16.msra.mxu0 %v1002
  %1030 = vmatpush.bf16.msra.mxu0 %v1001
  %1031 = vmatpush.bf16.msra.mxu0 %v1000
  %1032 = vmatpush.bf16.msra.mxu0 %v999
  %1033 = vmatpush.bf16.msra.mxu0 %v998
  %1034 = vmatpush.bf16.msra.mxu0 %v997
  %1035 = vmatpush.bf16.msra.mxu0 %v996
  %1036 = vmatmul.bf16.gmra.mxu0 %v926
  %v1037 = vpop.f32.mrf.mxu0
  %v1038 = vadd.f32 %v930, %v1037
  %v1039 = vpop.f32.mrf.mxu0
  %v1040 = vadd.f32 %v930, %v1039
  %1041 = vdwg.mxu0
  %1042 = vmatpush.bf16.msra.mxu0 %v1011
  %1043 = vmatpush.bf16.msra.mxu0 %v1010
  %1044 = vmatpush.bf16.msra.mxu0 %v1009
  %1045 = vmatpush.bf16.msra.mxu0 %v1008
  %1046 = vmatpush.bf16.msra.mxu0 %v1007
  %1047 = vmatpush.bf16.msra.mxu0 %v1006
  %1048 = vmatpush.bf16.msra.mxu0 %v1005
  %1049 = vmatpush.bf16.msra.mxu0 %v1004
  %1050 = vmatmul.bf16.gmra.mxu0 %v927
  %v1051 = vpop.f32.mrf.mxu0
  %v1052 = vadd.f32 %v1038, %v1051
  %v1053 = vpop.f32.mrf.mxu0
  %v1054 = vadd.f32 %v1040, %v1053
  %1055 = vdwg.mxu0
  %v1056 = vadd.f32 %v726, %v1052
  %v1057 = vadd.f32 %v727, %v1054
  %v1058 = vsel %vm47, %v1056, 0.0
  %1059 = vadd.xlane.f32.xlu0 %v1058
  %v1060 = vpop.xlane.xlu0 %1059
  %v1061 = vsel %vm47, %v1057, 0.0
  %1062 = vadd.xlane.f32.xlu0 %v1061
  %v1063 = vpop.xlane.xlu0 %1062
  %v1064 = vmul.f32 %v1060, %v60
  %v1065 = vmul.f32 %v1063, %v60
  %v1066 = vsub.f32 %v1056, %v1064
  %v1067 = vsub.f32 %v1057, %v1065
  %v1068 = vmul.f32 %v1066, %v1066
  %v1069 = vmul.f32 %v1067, %v1067
  %v1070 = vsel %vm47, %v1068, 0.0
  %1071 = vadd.xlane.f32.xlu0 %v1070
  %v1072 = vpop.xlane.xlu0 %1071
  %v1073 = vsel %vm47, %v1069, 0.0
  %1074 = vadd.xlane.f32.xlu0 %v1073
  %v1075 = vpop.xlane.xlu0 %1074
  %v1076 = vmul.f32 %v1072, %v60
  %v1077 = vmul.f32 %v1075, %v60
  %v1078 = vadd.f32 %v1076, 1e-05
  %v1079 = vadd.f32 %v1077, 1e-05
  %v1080 = vrsqrt.pop %v1078
  %v1081 = vmul.f32 %v1080, %v1078
  %v1082 = vmul.f32 %v1081, %v1080
  %v1083 = vmul.f32 0.5, %v1082
  %v1084 = vsub.f32 1.5, %v1083
  %v1085 = vmul.f32 %v1080, %v1084
  %vm1086 = vweird.f32 %v1078
  %vm1087 = vweird.f32 %v1080
  %vm1088 = vmor %vm1086, %vm1087
  %v1089 = vsel %vm1088, %v1080, %v1085
  %v1090 = vrsqrt.pop %v1079
  %v1091 = vmul.f32 %v1090, %v1079
  %v1092 = vmul.f32 %v1091, %v1090
  %v1093 = vmul.f32 0.5, %v1092
  %v1094 = vsub.f32 1.5, %v1093
  %v1095 = vmul.f32 %v1090, %v1094
  %vm1096 = vweird.f32 %v1079
  %vm1097 = vweird.f32 %v1090
  %vm1098 = vmor %vm1096, %vm1097
  %v1099 = vsel %vm1098, %v1090, %v1095
  %v1100 = vmul.f32 %v1066, %v1089
  %v1101 = vmul.f32 %v1067, %v1099
  %s1102 = scalar_lea.vmem %s1, 64
  %v1103 = vld [vmem:[%s1102] sm:$0xff]
  %v1104 = vld [vmem:[%s1102 + $0x8] sm:$0xff]
  %v1105 = vld [vmem:[%s1102 + $0x10] sm:$0xff]
  %v1106 = vld [vmem:[%s1102 + $0x18] sm:$0xff]
  %v1107 = vld [vmem:[%s1102 + $0x20] sm:$0xff]
  %v1108 = vld [vmem:[%s1102 + $0x28] sm:$0xff]
  %v1109 = vld [vmem:[%s1102 + $0x30] sm:$0xff]
  %v1110 = vld [vmem:[%s1102 + $0x38] sm:$0xff]
  %v1111 = vpack.c.bf16 %v1101, %v1100
  %s1112 = scalar_lea.vmem %s2, 2
  %v1113 = vld [vmem:[%s1112] sm:$0x3]
  %v1115 = vperm.slane %v1113, 0
  %v1116 = vperm.slane %v1113, 1
  %v1127 = vunpack.c.l.b16 %v1103
  %v1128 = vunpack.c.h.b16 %v1103
  %v1129 = vunpack.c.l.b16 %v1104
  %v1130 = vunpack.c.h.b16 %v1104
  %v1131 = vunpack.c.l.b16 %v1105
  %v1132 = vunpack.c.h.b16 %v1105
  %v1133 = vunpack.c.l.b16 %v1106
  %v1134 = vunpack.c.h.b16 %v1106
  %v1135 = vunpack.c.l.b16 %v1107
  %v1136 = vunpack.c.h.b16 %v1107
  %v1137 = vunpack.c.l.b16 %v1108
  %v1138 = vunpack.c.h.b16 %v1108
  %v1139 = vunpack.c.l.b16 %v1109
  %v1140 = vunpack.c.h.b16 %v1109
  %v1141 = vunpack.c.l.b16 %v1110
  %v1142 = vunpack.c.h.b16 %v1110
  %v1143 = vpack.c.b16 %v1129, %v1127
  %v1144 = vpack.c.b16 %v1130, %v1128
  %v1145 = vpack.c.b16 %v1133, %v1131
  %v1146 = vpack.c.b16 %v1134, %v1132
  %v1147 = vpack.c.b16 %v1137, %v1135
  %v1148 = vpack.c.b16 %v1138, %v1136
  %v1149 = vpack.c.b16 %v1141, %v1139
  %v1150 = vpack.c.b16 %v1142, %v1140
  %v1160 = vsel %vm47, %v1111, 0
  %1162 = vmatpush.bf16.msra.mxu0 0
  %1163 = vmatpush.bf16.msra.mxu0 0
  %1164 = vmatpush.bf16.msra.mxu0 0
  %1165 = vmatpush.bf16.msra.mxu0 0
  %1166 = vmatpush.bf16.msra.mxu0 %v1149
  %1167 = vmatpush.bf16.msra.mxu0 %v1147
  %1168 = vmatpush.bf16.msra.mxu0 %v1145
  %1169 = vmatpush.bf16.msra.mxu0 %v1143
  %1170 = vmatmul.bf16.gmra.mxu0 %v1160
  %v1171 = vpop.f32.mrf.mxu0
  %v1172 = vadd.f32 %v1115, %v1171
  %v1173 = vpop.f32.mrf.mxu0
  %v1174 = vadd.f32 %v1115, %v1173
  %1175 = vdwg.mxu0
  %1176 = vmatpush.bf16.msra.mxu0 0
  %1177 = vmatpush.bf16.msra.mxu0 0
  %1178 = vmatpush.bf16.msra.mxu0 0
  %1179 = vmatpush.bf16.msra.mxu0 0
  %1180 = vmatpush.bf16.msra.mxu0 %v1150
  %1181 = vmatpush.bf16.msra.mxu0 %v1148
  %1182 = vmatpush.bf16.msra.mxu0 %v1146
  %1183 = vmatpush.bf16.msra.mxu0 %v1144
  %1184 = vmatmul.bf16.gmra.mxu0 %v1160
  %v1185 = vpop.f32.mrf.mxu0
  %v1186 = vadd.f32 %v1116, %v1185
  %v1187 = vpop.f32.mrf.mxu0
  %v1188 = vadd.f32 %v1116, %v1187
  %1189 = vdwg.mxu0
  %v1190 = vpack.c.bf16 %v1186, %v1172
  %v1192 = vunpack.c.l.b16 %v1190
  %v1193 = vpack.c.b16 %v1192, %v1192
  %1194 = vrot.lane.b32.xlu0 %v1193, 64
  %v1195 = vpop.permute.xlu0 %1194
  %v1197 = vsel %vm191, %v1190, 0
  %v1200 = vsel %vm191, %v1195, 0
  %1202 = vmatpush.bf16.xpose.msra.mxu0 0
  %1203 = vmatpush.bf16.xpose.msra.mxu0 0
  %1204 = vmatpush.bf16.xpose.msra.mxu0 0
  %1205 = vmatpush.bf16.xpose.msra.mxu0 0
  %1206 = vmatpush.bf16.xpose.msra.mxu0 0
  %1207 = vmatpush.bf16.xpose.msra.mxu0 0
  %1208 = vmatpush.bf16.xpose.msra.mxu0 0
  %1209 = vmatpush.bf16.xpose.msra.mxu0 %v1200
  %1210 = vmatmul.bf16.gmra.mxu0 %v1197
  %v1211 = vpop.f32.mrf.mxu0
  %v1212 = vadd.f32 %v46, %v1211
  %v1213 = vpop.f32.mrf.mxu0
  %1214 = vdwg.mxu0
  %v1215 = vsel %vm211, %v1212, -inf
  %1216 = vmax.xlane.f32.xlu0 %v1215
  %v1217 = vpop.xlane.xlu0 %1216
  %v1218 = vsub.f32 %v1212, %v1217
  %v1219 = vmul.f32 %v1218, 1.442695
  %v1220 = vpow.pop %v1219
  %v1221 = vsel %vm211, %v1220, 0.0
  %1222 = vadd.xlane.f32.xlu0 %v1221
  %v1223 = vpop.xlane.xlu0 %1222
  %v1224 = vrcp.pop %v1223
  %v1225 = vmul.f32 %v1220, %v1224
  %v1226 = vpack.c.bf16 %v1225, %v1225
  %v1227 = vunpack.c.h.b16 %v1190
  %v1228 = vpack.c.b16 %v1227, %v1227
  %v1230 = vsel %vm211, %v1226, 0
  %v1233 = vsel %vm229, %v1228, 0
  %1235 = vmatpush.bf16.msra.mxu0 0
  %1236 = vmatpush.bf16.msra.mxu0 0
  %1237 = vmatpush.bf16.msra.mxu0 0
  %1238 = vmatpush.bf16.msra.mxu0 0
  %1239 = vmatpush.bf16.msra.mxu0 0
  %1240 = vmatpush.bf16.msra.mxu0 0
  %1241 = vmatpush.bf16.msra.mxu0 0
  %1242 = vmatpush.bf16.msra.mxu0 %v1233
  %1243 = vmatmul.bf16.gmra.mxu0 %v1230
  %v1244 = vpop.f32.mrf.mxu0
  %v1245 = vadd.f32 0.0, %v1244
  %v1246 = vpop.f32.mrf.mxu0
  %1247 = vdwg.mxu0
  %1248 = vrot.lane.b32.xlu0 %v1193, 112
  %v1249 = vpop.permute.xlu0 %1248
  %1250 = vrot.lane.b32.xlu0 %v1193, 48
  %v1251 = vpop.permute.xlu0 %1250
  %v1253 = vsel %vm191, %v1249, 0
  %v1256 = vsel %vm191, %v1251, 0
  %1258 = vmatpush.bf16.xpose.msra.mxu0 0
  %1259 = vmatpush.bf16.xpose.msra.mxu0 0
  %1260 = vmatpush.bf16.xpose.msra.mxu0 0
  %1261 = vmatpush.bf16.xpose.msra.mxu0 0
  %1262 = vmatpush.bf16.xpose.msra.mxu0 0
  %1263 = vmatpush.bf16.xpose.msra.mxu0 0
  %1264 = vmatpush.bf16.xpose.msra.mxu0 0
  %1265 = vmatpush.bf16.xpose.msra.mxu0 %v1256
  %1266 = vmatmul.bf16.gmra.mxu0 %v1253
  %v1267 = vpop.f32.mrf.mxu0
  %v1268 = vadd.f32 %v46, %v1267
  %v1269 = vpop.f32.mrf.mxu0
  %1270 = vdwg.mxu0
  %v1271 = vsel %vm211, %v1268, -inf
  %1272 = vmax.xlane.f32.xlu0 %v1271
  %v1273 = vpop.xlane.xlu0 %1272
  %v1274 = vsub.f32 %v1268, %v1273
  %v1275 = vmul.f32 %v1274, 1.442695
  %v1276 = vpow.pop %v1275
  %v1277 = vsel %vm211, %v1276, 0.0
  %1278 = vadd.xlane.f32.xlu0 %v1277
  %v1279 = vpop.xlane.xlu0 %1278
  %v1280 = vrcp.pop %v1279
  %v1281 = vmul.f32 %v1276, %v1280
  %v1282 = vpack.c.bf16 %v1281, %v1281
  %1283 = vrot.lane.b32.xlu0 %v1228, 112
  %v1284 = vpop.permute.xlu0 %1283
  %v1286 = vsel %vm211, %v1282, 0
  %v1289 = vsel %vm229, %v1284, 0
  %1291 = vmatpush.bf16.msra.mxu0 0
  %1292 = vmatpush.bf16.msra.mxu0 0
  %1293 = vmatpush.bf16.msra.mxu0 0
  %1294 = vmatpush.bf16.msra.mxu0 0
  %1295 = vmatpush.bf16.msra.mxu0 0
  %1296 = vmatpush.bf16.msra.mxu0 0
  %1297 = vmatpush.bf16.msra.mxu0 0
  %1298 = vmatpush.bf16.msra.mxu0 %v1289
  %1299 = vmatmul.bf16.gmra.mxu0 %v1286
  %v1300 = vpop.f32.mrf.mxu0
  %v1301 = vadd.f32 0.0, %v1300
  %v1302 = vpop.f32.mrf.mxu0
  %1303 = vdwg.mxu0
  %1304 = vrot.lane.b32.xlu0 %v1193, 96
  %v1305 = vpop.permute.xlu0 %1304
  %1306 = vrot.lane.b32.xlu0 %v1193, 32
  %v1307 = vpop.permute.xlu0 %1306
  %v1309 = vsel %vm191, %v1305, 0
  %v1312 = vsel %vm191, %v1307, 0
  %1314 = vmatpush.bf16.xpose.msra.mxu0 0
  %1315 = vmatpush.bf16.xpose.msra.mxu0 0
  %1316 = vmatpush.bf16.xpose.msra.mxu0 0
  %1317 = vmatpush.bf16.xpose.msra.mxu0 0
  %1318 = vmatpush.bf16.xpose.msra.mxu0 0
  %1319 = vmatpush.bf16.xpose.msra.mxu0 0
  %1320 = vmatpush.bf16.xpose.msra.mxu0 0
  %1321 = vmatpush.bf16.xpose.msra.mxu0 %v1312
  %1322 = vmatmul.bf16.gmra.mxu0 %v1309
  %v1323 = vpop.f32.mrf.mxu0
  %v1324 = vadd.f32 %v46, %v1323
  %v1325 = vpop.f32.mrf.mxu0
  %1326 = vdwg.mxu0
  %v1327 = vsel %vm211, %v1324, -inf
  %1328 = vmax.xlane.f32.xlu0 %v1327
  %v1329 = vpop.xlane.xlu0 %1328
  %v1330 = vsub.f32 %v1324, %v1329
  %v1331 = vmul.f32 %v1330, 1.442695
  %v1332 = vpow.pop %v1331
  %v1333 = vsel %vm211, %v1332, 0.0
  %1334 = vadd.xlane.f32.xlu0 %v1333
  %v1335 = vpop.xlane.xlu0 %1334
  %v1336 = vrcp.pop %v1335
  %v1337 = vmul.f32 %v1332, %v1336
  %v1338 = vpack.c.bf16 %v1337, %v1337
  %1339 = vrot.lane.b32.xlu0 %v1228, 96
  %v1340 = vpop.permute.xlu0 %1339
  %v1342 = vsel %vm211, %v1338, 0
  %v1345 = vsel %vm229, %v1340, 0
  %1347 = vmatpush.bf16.msra.mxu0 0
  %1348 = vmatpush.bf16.msra.mxu0 0
  %1349 = vmatpush.bf16.msra.mxu0 0
  %1350 = vmatpush.bf16.msra.mxu0 0
  %1351 = vmatpush.bf16.msra.mxu0 0
  %1352 = vmatpush.bf16.msra.mxu0 0
  %1353 = vmatpush.bf16.msra.mxu0 0
  %1354 = vmatpush.bf16.msra.mxu0 %v1345
  %1355 = vmatmul.bf16.gmra.mxu0 %v1342
  %v1356 = vpop.f32.mrf.mxu0
  %v1357 = vadd.f32 0.0, %v1356
  %v1358 = vpop.f32.mrf.mxu0
  %1359 = vdwg.mxu0
  %1360 = vrot.lane.b32.xlu0 %v1193, 80
  %v1361 = vpop.permute.xlu0 %1360
  %1362 = vrot.lane.b32.xlu0 %v1193, 16
  %v1363 = vpop.permute.xlu0 %1362
  %v1365 = vsel %vm191, %v1361, 0
  %v1368 = vsel %vm191, %v1363, 0
  %1370 = vmatpush.bf16.xpose.msra.mxu0 0
  %1371 = vmatpush.bf16.xpose.msra.mxu0 0
  %1372 = vmatpush.bf16.xpose.msra.mxu0 0
  %1373 = vmatpush.bf16.xpose.msra.mxu0 0
  %1374 = vmatpush.bf16.xpose.msra.mxu0 0
  %1375 = vmatpush.bf16.xpose.msra.mxu0 0
  %1376 = vmatpush.bf16.xpose.msra.mxu0 0
  %1377 = vmatpush.bf16.xpose.msra.mxu0 %v1368
  %1378 = vmatmul.bf16.gmra.mxu0 %v1365
  %v1379 = vpop.f32.mrf.mxu0
  %v1380 = vadd.f32 %v46, %v1379
  %v1381 = vpop.f32.mrf.mxu0
  %1382 = vdwg.mxu0
  %v1383 = vsel %vm211, %v1380, -inf
  %1384 = vmax.xlane.f32.xlu0 %v1383
  %v1385 = vpop.xlane.xlu0 %1384
  %v1386 = vsub.f32 %v1380, %v1385
  %v1387 = vmul.f32 %v1386, 1.442695
  %v1388 = vpow.pop %v1387
  %v1389 = vsel %vm211, %v1388, 0.0
  %1390 = vadd.xlane.f32.xlu0 %v1389
  %v1391 = vpop.xlane.xlu0 %1390
  %v1392 = vrcp.pop %v1391
  %v1393 = vmul.f32 %v1388, %v1392
  %v1394 = vpack.c.bf16 %v1393, %v1393
  %1395 = vrot.lane.b32.xlu0 %v1228, 80
  %v1396 = vpop.permute.xlu0 %1395
  %v1398 = vsel %vm211, %v1394, 0
  %v1401 = vsel %vm229, %v1396, 0
  %1403 = vmatpush.bf16.msra.mxu0 0
  %1404 = vmatpush.bf16.msra.mxu0 0
  %1405 = vmatpush.bf16.msra.mxu0 0
  %1406 = vmatpush.bf16.msra.mxu0 0
  %1407 = vmatpush.bf16.msra.mxu0 0
  %1408 = vmatpush.bf16.msra.mxu0 0
  %1409 = vmatpush.bf16.msra.mxu0 0
  %1410 = vmatpush.bf16.msra.mxu0 %v1401
  %1411 = vmatmul.bf16.gmra.mxu0 %v1398
  %v1412 = vpop.f32.mrf.mxu0
  %v1413 = vadd.f32 0.0, %v1412
  %v1414 = vpop.f32.mrf.mxu0
  %1415 = vdwg.mxu0
  %1417 = vrot.lane.b32.xlu0 %v1301, 16
  %v1418 = vpop.permute.xlu0 %1417
  %1421 = vrot.lane.b32.xlu0 %v1357, 32
  %v1422 = vpop.permute.xlu0 %1421
  %1425 = vrot.lane.b32.xlu0 %v1413, 48
  %v1426 = vpop.permute.xlu0 %1425
  %v1428 = vsel %vm191, %v1245, %v1418
  %v1429 = vsel %vm427, %v1428, %v1422
  %v1430 = vsel %vm429, %v1429, %v1426
  %v1431 = vpack.c.bf16 %v1188, %v1174
  %v1433 = vunpack.c.l.b16 %v1431
  %v1434 = vpack.c.b16 %v1433, %v1433
  %1435 = vrot.lane.b32.xlu0 %v1434, 64
  %v1436 = vpop.permute.xlu0 %1435
  %v1438 = vsel %vm191, %v1431, 0
  %v1441 = vsel %vm191, %v1436, 0
  %1443 = vmatpush.bf16.xpose.msra.mxu0 0
  %1444 = vmatpush.bf16.xpose.msra.mxu0 0
  %1445 = vmatpush.bf16.xpose.msra.mxu0 0
  %1446 = vmatpush.bf16.xpose.msra.mxu0 0
  %1447 = vmatpush.bf16.xpose.msra.mxu0 0
  %1448 = vmatpush.bf16.xpose.msra.mxu0 0
  %1449 = vmatpush.bf16.xpose.msra.mxu0 0
  %1450 = vmatpush.bf16.xpose.msra.mxu0 %v1441
  %1451 = vmatmul.bf16.gmra.mxu0 %v1438
  %v1452 = vpop.f32.mrf.mxu0
  %v1453 = vadd.f32 %v46, %v1452
  %v1454 = vpop.f32.mrf.mxu0
  %1455 = vdwg.mxu0
  %v1456 = vsel %vm211, %v1453, -inf
  %1457 = vmax.xlane.f32.xlu0 %v1456
  %v1458 = vpop.xlane.xlu0 %1457
  %v1459 = vsub.f32 %v1453, %v1458
  %v1460 = vmul.f32 %v1459, 1.442695
  %v1461 = vpow.pop %v1460
  %v1462 = vsel %vm211, %v1461, 0.0
  %1463 = vadd.xlane.f32.xlu0 %v1462
  %v1464 = vpop.xlane.xlu0 %1463
  %v1465 = vrcp.pop %v1464
  %v1466 = vmul.f32 %v1461, %v1465
  %v1467 = vpack.c.bf16 %v1466, %v1466
  %v1468 = vunpack.c.h.b16 %v1431
  %v1469 = vpack.c.b16 %v1468, %v1468
  %v1471 = vsel %vm211, %v1467, 0
  %v1474 = vsel %vm229, %v1469, 0
  %1476 = vmatpush.bf16.msra.mxu0 0
  %1477 = vmatpush.bf16.msra.mxu0 0
  %1478 = vmatpush.bf16.msra.mxu0 0
  %1479 = vmatpush.bf16.msra.mxu0 0
  %1480 = vmatpush.bf16.msra.mxu0 0
  %1481 = vmatpush.bf16.msra.mxu0 0
  %1482 = vmatpush.bf16.msra.mxu0 0
  %1483 = vmatpush.bf16.msra.mxu0 %v1474
  %1484 = vmatmul.bf16.gmra.mxu0 %v1471
  %v1485 = vpop.f32.mrf.mxu0
  %v1486 = vadd.f32 0.0, %v1485
  %v1487 = vpop.f32.mrf.mxu0
  %1488 = vdwg.mxu0
  %1489 = vrot.lane.b32.xlu0 %v1434, 112
  %v1490 = vpop.permute.xlu0 %1489
  %1491 = vrot.lane.b32.xlu0 %v1434, 48
  %v1492 = vpop.permute.xlu0 %1491
  %v1494 = vsel %vm191, %v1490, 0
  %v1497 = vsel %vm191, %v1492, 0
  %1499 = vmatpush.bf16.xpose.msra.mxu0 0
  %1500 = vmatpush.bf16.xpose.msra.mxu0 0
  %1501 = vmatpush.bf16.xpose.msra.mxu0 0
  %1502 = vmatpush.bf16.xpose.msra.mxu0 0
  %1503 = vmatpush.bf16.xpose.msra.mxu0 0
  %1504 = vmatpush.bf16.xpose.msra.mxu0 0
  %1505 = vmatpush.bf16.xpose.msra.mxu0 0
  %1506 = vmatpush.bf16.xpose.msra.mxu0 %v1497
  %1507 = vmatmul.bf16.gmra.mxu0 %v1494
  %v1508 = vpop.f32.mrf.mxu0
  %v1509 = vadd.f32 %v46, %v1508
  %v1510 = vpop.f32.mrf.mxu0
  %1511 = vdwg.mxu0
  %v1512 = vsel %vm211, %v1509, -inf
  %1513 = vmax.xlane.f32.xlu0 %v1512
  %v1514 = vpop.xlane.xlu0 %1513
  %v1515 = vsub.f32 %v1509, %v1514
  %v1516 = vmul.f32 %v1515, 1.442695
  %v1517 = vpow.pop %v1516
  %v1518 = vsel %vm211, %v1517, 0.0
  %1519 = vadd.xlane.f32.xlu0 %v1518
  %v1520 = vpop.xlane.xlu0 %1519
  %v1521 = vrcp.pop %v1520
  %v1522 = vmul.f32 %v1517, %v1521
  %v1523 = vpack.c.bf16 %v1522, %v1522
  %1524 = vrot.lane.b32.xlu0 %v1469, 112
  %v1525 = vpop.permute.xlu0 %1524
  %v1527 = vsel %vm211, %v1523, 0
  %v1530 = vsel %vm229, %v1525, 0
  %1532 = vmatpush.bf16.msra.mxu0 0
  %1533 = vmatpush.bf16.msra.mxu0 0
  %1534 = vmatpush.bf16.msra.mxu0 0
  %1535 = vmatpush.bf16.msra.mxu0 0
  %1536 = vmatpush.bf16.msra.mxu0 0
  %1537 = vmatpush.bf16.msra.mxu0 0
  %1538 = vmatpush.bf16.msra.mxu0 0
  %1539 = vmatpush.bf16.msra.mxu0 %v1530
  %1540 = vmatmul.bf16.gmra.mxu0 %v1527
  %v1541 = vpop.f32.mrf.mxu0
  %v1542 = vadd.f32 0.0, %v1541
  %v1543 = vpop.f32.mrf.mxu0
  %1544 = vdwg.mxu0
  %1545 = vrot.lane.b32.xlu0 %v1434, 96
  %v1546 = vpop.permute.xlu0 %1545
  %1547 = vrot.lane.b32.xlu0 %v1434, 32
  %v1548 = vpop.permute.xlu0 %1547
  %v1550 = vsel %vm191, %v1546, 0
  %v1553 = vsel %vm191, %v1548, 0
  %1555 = vmatpush.bf16.xpose.msra.mxu0 0
  %1556 = vmatpush.bf16.xpose.msra.mxu0 0
  %1557 = vmatpush.bf16.xpose.msra.mxu0 0
  %1558 = vmatpush.bf16.xpose.msra.mxu0 0
  %1559 = vmatpush.bf16.xpose.msra.mxu0 0
  %1560 = vmatpush.bf16.xpose.msra.mxu0 0
  %1561 = vmatpush.bf16.xpose.msra.mxu0 0
  %1562 = vmatpush.bf16.xpose.msra.mxu0 %v1553
  %1563 = vmatmul.bf16.gmra.mxu0 %v1550
  %v1564 = vpop.f32.mrf.mxu0
  %v1565 = vadd.f32 %v46, %v1564
  %v1566 = vpop.f32.mrf.mxu0
  %1567 = vdwg.mxu0
  %v1568 = vsel %vm211, %v1565, -inf
  %1569 = vmax.xlane.f32.xlu0 %v1568
  %v1570 = vpop.xlane.xlu0 %1569
  %v1571 = vsub.f32 %v1565, %v1570
  %v1572 = vmul.f32 %v1571, 1.442695
  %v1573 = vpow.pop %v1572
  %v1574 = vsel %vm211, %v1573, 0.0
  %1575 = vadd.xlane.f32.xlu0 %v1574
  %v1576 = vpop.xlane.xlu0 %1575
  %v1577 = vrcp.pop %v1576
  %v1578 = vmul.f32 %v1573, %v1577
  %v1579 = vpack.c.bf16 %v1578, %v1578
  %1580 = vrot.lane.b32.xlu0 %v1469, 96
  %v1581 = vpop.permute.xlu0 %1580
  %v1583 = vsel %vm211, %v1579, 0
  %v1586 = vsel %vm229, %v1581, 0
  %1588 = vmatpush.bf16.msra.mxu0 0
  %1589 = vmatpush.bf16.msra.mxu0 0
  %1590 = vmatpush.bf16.msra.mxu0 0
  %1591 = vmatpush.bf16.msra.mxu0 0
  %1592 = vmatpush.bf16.msra.mxu0 0
  %1593 = vmatpush.bf16.msra.mxu0 0
  %1594 = vmatpush.bf16.msra.mxu0 0
  %1595 = vmatpush.bf16.msra.mxu0 %v1586
  %1596 = vmatmul.bf16.gmra.mxu0 %v1583
  %v1597 = vpop.f32.mrf.mxu0
  %v1598 = vadd.f32 0.0, %v1597
  %v1599 = vpop.f32.mrf.mxu0
  %1600 = vdwg.mxu0
  %1601 = vrot.lane.b32.xlu0 %v1434, 80
  %v1602 = vpop.permute.xlu0 %1601
  %1603 = vrot.lane.b32.xlu0 %v1434, 16
  %v1604 = vpop.permute.xlu0 %1603
  %v1606 = vsel %vm191, %v1602, 0
  %v1609 = vsel %vm191, %v1604, 0
  %1611 = vmatpush.bf16.xpose.msra.mxu0 0
  %1612 = vmatpush.bf16.xpose.msra.mxu0 0
  %1613 = vmatpush.bf16.xpose.msra.mxu0 0
  %1614 = vmatpush.bf16.xpose.msra.mxu0 0
  %1615 = vmatpush.bf16.xpose.msra.mxu0 0
  %1616 = vmatpush.bf16.xpose.msra.mxu0 0
  %1617 = vmatpush.bf16.xpose.msra.mxu0 0
  %1618 = vmatpush.bf16.xpose.msra.mxu0 %v1609
  %1619 = vmatmul.bf16.gmra.mxu0 %v1606
  %v1620 = vpop.f32.mrf.mxu0
  %v1621 = vadd.f32 %v46, %v1620
  %v1622 = vpop.f32.mrf.mxu0
  %1623 = vdwg.mxu0
  %v1624 = vsel %vm211, %v1621, -inf
  %1625 = vmax.xlane.f32.xlu0 %v1624
  %v1626 = vpop.xlane.xlu0 %1625
  %v1627 = vsub.f32 %v1621, %v1626
  %v1628 = vmul.f32 %v1627, 1.442695
  %v1629 = vpow.pop %v1628
  %v1630 = vsel %vm211, %v1629, 0.0
  %1631 = vadd.xlane.f32.xlu0 %v1630
  %v1632 = vpop.xlane.xlu0 %1631
  %v1633 = vrcp.pop %v1632
  %v1634 = vmul.f32 %v1629, %v1633
  %v1635 = vpack.c.bf16 %v1634, %v1634
  %1636 = vrot.lane.b32.xlu0 %v1469, 80
  %v1637 = vpop.permute.xlu0 %1636
  %v1639 = vsel %vm211, %v1635, 0
  %v1642 = vsel %vm229, %v1637, 0
  %1644 = vmatpush.bf16.msra.mxu0 0
  %1645 = vmatpush.bf16.msra.mxu0 0
  %1646 = vmatpush.bf16.msra.mxu0 0
  %1647 = vmatpush.bf16.msra.mxu0 0
  %1648 = vmatpush.bf16.msra.mxu0 0
  %1649 = vmatpush.bf16.msra.mxu0 0
  %1650 = vmatpush.bf16.msra.mxu0 0
  %1651 = vmatpush.bf16.msra.mxu0 %v1642
  %1652 = vmatmul.bf16.gmra.mxu0 %v1639
  %v1653 = vpop.f32.mrf.mxu0
  %v1654 = vadd.f32 0.0, %v1653
  %v1655 = vpop.f32.mrf.mxu0
  %1656 = vdwg.mxu0
  %1658 = vrot.lane.b32.xlu0 %v1542, 16
  %v1659 = vpop.permute.xlu0 %1658
  %1662 = vrot.lane.b32.xlu0 %v1598, 32
  %v1663 = vpop.permute.xlu0 %1662
  %1666 = vrot.lane.b32.xlu0 %v1654, 48
  %v1667 = vpop.permute.xlu0 %1666
  %v1669 = vsel %vm191, %v1486, %v1659
  %v1670 = vsel %vm427, %v1669, %v1663
  %v1671 = vsel %vm429, %v1670, %v1667
  %s1672 = scalar_lea.vmem %s3, 32
  %v1673 = vld [vmem:[%s1672] sm:$0xf]
  %v1674 = vld [vmem:[%s1672 + $0x4] sm:$0xf]
  %v1675 = vld [vmem:[%s1672 + $0x8] sm:$0xf]
  %v1676 = vld [vmem:[%s1672 + $0xc] sm:$0xf]
  %v1677 = vld [vmem:[%s1672 + $0x10] sm:$0xf]
  %v1678 = vld [vmem:[%s1672 + $0x14] sm:$0xf]
  %v1679 = vld [vmem:[%s1672 + $0x18] sm:$0xf]
  %v1680 = vld [vmem:[%s1672 + $0x1c] sm:$0xf]
  %v1681 = vpack.c.bf16 %v1671, %v1430
  %s1682 = scalar_lea.vmem %s4, 1
  %v1683 = vld [vmem:[%s1682] sm:$0x1]
  %v1685 = vperm.slane %v1683, 0
  %v1695 = vunpack.c.l.b16 %v1673
  %v1696 = vunpack.c.l.b16 %v1674
  %v1697 = vunpack.c.l.b16 %v1675
  %v1698 = vunpack.c.l.b16 %v1676
  %v1699 = vunpack.c.l.b16 %v1677
  %v1700 = vunpack.c.l.b16 %v1678
  %v1701 = vunpack.c.l.b16 %v1679
  %v1702 = vunpack.c.l.b16 %v1680
  %v1703 = vpack.c.b16 %v1696, %v1695
  %v1704 = vpack.c.b16 %v1698, %v1697
  %v1705 = vpack.c.b16 %v1700, %v1699
  %v1706 = vpack.c.b16 %v1702, %v1701
  %v1712 = vsel %vm47, %v1681, 0
  %1714 = vmatpush.bf16.msra.mxu0 0
  %1715 = vmatpush.bf16.msra.mxu0 0
  %1716 = vmatpush.bf16.msra.mxu0 0
  %1717 = vmatpush.bf16.msra.mxu0 0
  %1718 = vmatpush.bf16.msra.mxu0 %v1706
  %1719 = vmatpush.bf16.msra.mxu0 %v1705
  %1720 = vmatpush.bf16.msra.mxu0 %v1704
  %1721 = vmatpush.bf16.msra.mxu0 %v1703
  %1722 = vmatmul.bf16.gmra.mxu0 %v1712
  %v1723 = vpop.f32.mrf.mxu0
  %v1724 = vadd.f32 %v1685, %v1723
  %v1725 = vpop.f32.mrf.mxu0
  %v1726 = vadd.f32 %v1685, %v1725
  %1727 = vdwg.mxu0
  %v1728 = vadd.f32 %v1056, %v1724
  %v1729 = vadd.f32 %v1057, %v1726
  %v1730 = vsel %vm47, %v1728, 0.0
  %1731 = vadd.xlane.f32.xlu0 %v1730
  %v1732 = vpop.xlane.xlu0 %1731
  %v1733 = vsel %vm47, %v1729, 0.0
  %1734 = vadd.xlane.f32.xlu0 %v1733
  %v1735 = vpop.xlane.xlu0 %1734
  %v1736 = vmul.f32 %v1732, %v60
  %v1737 = vmul.f32 %v1735, %v60
  %v1738 = vsub.f32 %v1728, %v1736
  %v1739 = vsub.f32 %v1729, %v1737
  %v1740 = vmul.f32 %v1738, %v1738
  %v1741 = vmul.f32 %v1739, %v1739
  %v1742 = vsel %vm47, %v1740, 0.0
  %1743 = vadd.xlane.f32.xlu0 %v1742
  %v1744 = vpop.xlane.xlu0 %1743
  %v1745 = vsel %vm47, %v1741, 0.0
  %1746 = vadd.xlane.f32.xlu0 %v1745
  %v1747 = vpop.xlane.xlu0 %1746
  %v1748 = vmul.f32 %v1744, %v60
  %v1749 = vmul.f32 %v1747, %v60
  %v1750 = vadd.f32 %v1748, 1e-05
  %v1751 = vadd.f32 %v1749, 1e-05
  %v1752 = vrsqrt.pop %v1750
  %v1753 = vmul.f32 %v1752, %v1750
  %v1754 = vmul.f32 %v1753, %v1752
  %v1755 = vmul.f32 0.5, %v1754
  %v1756 = vsub.f32 1.5, %v1755
  %v1757 = vmul.f32 %v1752, %v1756
  %vm1758 = vweird.f32 %v1750
  %vm1759 = vweird.f32 %v1752
  %vm1760 = vmor %vm1758, %vm1759
  %v1761 = vsel %vm1760, %v1752, %v1757
  %v1762 = vrsqrt.pop %v1751
  %v1763 = vmul.f32 %v1762, %v1751
  %v1764 = vmul.f32 %v1763, %v1762
  %v1765 = vmul.f32 0.5, %v1764
  %v1766 = vsub.f32 1.5, %v1765
  %v1767 = vmul.f32 %v1762, %v1766
  %vm1768 = vweird.f32 %v1751
  %vm1769 = vweird.f32 %v1762
  %vm1770 = vmor %vm1768, %vm1769
  %v1771 = vsel %vm1770, %v1762, %v1767
  %v1772 = vmul.f32 %v1738, %v1761
  %v1773 = vmul.f32 %v1739, %v1771
  %s1774 = scalar_lea.vmem %s5, 64
  %v1775 = vld [vmem:[%s1774] sm:$0xff]
  %v1776 = vld [vmem:[%s1774 + $0x8] sm:$0xff]
  %v1777 = vld [vmem:[%s1774 + $0x10] sm:$0xff]
  %v1778 = vld [vmem:[%s1774 + $0x18] sm:$0xff]
  %v1779 = vld [vmem:[%s1774 + $0x20] sm:$0xff]
  %v1780 = vld [vmem:[%s1774 + $0x28] sm:$0xff]
  %v1781 = vld [vmem:[%s1774 + $0x30] sm:$0xff]
  %v1782 = vld [vmem:[%s1774 + $0x38] sm:$0xff]
  %v1783 = vpack.c.bf16 %v1773, %v1772
  %s1784 = scalar_lea.vmem %s6, 2
  %v1785 = vld [vmem:[%s1784] sm:$0x3]
  %v1787 = vperm.slane %v1785, 0
  %v1788 = vperm.slane %v1785, 1
  %v1799 = vunpack.c.l.b16 %v1775
  %v1800 = vunpack.c.h.b16 %v1775
  %v1801 = vunpack.c.l.b16 %v1776
  %v1802 = vunpack.c.h.b16 %v1776
  %v1803 = vunpack.c.l.b16 %v1777
  %v1804 = vunpack.c.h.b16 %v1777
  %v1805 = vunpack.c.l.b16 %v1778
  %v1806 = vunpack.c.h.b16 %v1778
  %v1807 = vunpack.c.l.b16 %v1779
  %v1808 = vunpack.c.h.b16 %v1779
  %v1809 = vunpack.c.l.b16 %v1780
  %v1810 = vunpack.c.h.b16 %v1780
  %v1811 = vunpack.c.l.b16 %v1781
  %v1812 = vunpack.c.h.b16 %v1781
  %v1813 = vunpack.c.l.b16 %v1782
  %v1814 = vunpack.c.h.b16 %v1782
  %v1815 = vpack.c.b16 %v1801, %v1799
  %v1816 = vpack.c.b16 %v1802, %v1800
  %v1817 = vpack.c.b16 %v1805, %v1803
  %v1818 = vpack.c.b16 %v1806, %v1804
  %v1819 = vpack.c.b16 %v1809, %v1807
  %v1820 = vpack.c.b16 %v1810, %v1808
  %v1821 = vpack.c.b16 %v1813, %v1811
  %v1822 = vpack.c.b16 %v1814, %v1812
  %v1832 = vsel %vm47, %v1783, 0
  %1834 = vmatpush.bf16.msra.mxu0 0
  %1835 = vmatpush.bf16.msra.mxu0 0
  %1836 = vmatpush.bf16.msra.mxu0 0
  %1837 = vmatpush.bf16.msra.mxu0 0
  %1838 = vmatpush.bf16.msra.mxu0 %v1821
  %1839 = vmatpush.bf16.msra.mxu0 %v1819
  %1840 = vmatpush.bf16.msra.mxu0 %v1817
  %1841 = vmatpush.bf16.msra.mxu0 %v1815
  %1842 = vmatmul.bf16.gmra.mxu0 %v1832
  %v1843 = vpop.f32.mrf.mxu0
  %v1844 = vadd.f32 %v1787, %v1843
  %v1845 = vpop.f32.mrf.mxu0
  %v1846 = vadd.f32 %v1787, %v1845
  %1847 = vdwg.mxu0
  %1848 = vmatpush.bf16.msra.mxu0 0
  %1849 = vmatpush.bf16.msra.mxu0 0
  %1850 = vmatpush.bf16.msra.mxu0 0
  %1851 = vmatpush.bf16.msra.mxu0 0
  %1852 = vmatpush.bf16.msra.mxu0 %v1822
  %1853 = vmatpush.bf16.msra.mxu0 %v1820
  %1854 = vmatpush.bf16.msra.mxu0 %v1818
  %1855 = vmatpush.bf16.msra.mxu0 %v1816
  %1856 = vmatmul.bf16.gmra.mxu0 %v1832
  %v1857 = vpop.f32.mrf.mxu0
  %v1858 = vadd.f32 %v1788, %v1857
  %v1859 = vpop.f32.mrf.mxu0
  %v1860 = vadd.f32 %v1788, %v1859
  %1861 = vdwg.mxu0
  %v1862 = vmul.f32 %v1844, %v1844
  %v1863 = vmul.f32 %v1858, %v1858
  %v1864 = vmul.f32 %v1846, %v1846
  %v1865 = vmul.f32 %v1860, %v1860
  %v1866 = vmul.f32 %v1844, %v1862
  %v1867 = vmul.f32 %v1858, %v1863
  %v1868 = vmul.f32 %v1846, %v1864
  %v1869 = vmul.f32 %v1860, %v1865
  %v1870 = vmul.f32 %v1866, 0.044715
  %v1871 = vmul.f32 %v1867, 0.044715
  %v1872 = vmul.f32 %v1868, 0.044715
  %v1873 = vmul.f32 %v1869, 0.044715
  %v1874 = vadd.f32 %v1844, %v1870
  %v1875 = vadd.f32 %v1858, %v1871
  %v1876 = vadd.f32 %v1846, %v1872
  %v1877 = vadd.f32 %v1860, %v1873
  %v1878 = vmul.f32 %v1874, 0.7978846
  %v1879 = vmul.f32 %v1875, 0.7978846
  %v1880 = vmul.f32 %v1876, 0.7978846
  %v1881 = vmul.f32 %v1877, 0.7978846
  %v1882 = vtanh.pop %v1878
  %v1883 = vtanh.pop %v1879
  %v1884 = vtanh.pop %v1880
  %v1885 = vtanh.pop %v1881
  %v1886 = vadd.f32 %v1882, 1.0
  %v1887 = vadd.f32 %v1883, 1.0
  %v1888 = vadd.f32 %v1884, 1.0
  %v1889 = vadd.f32 %v1885, 1.0
  %v1890 = vmul.f32 %v1886, 0.5
  %v1891 = vmul.f32 %v1887, 0.5
  %v1892 = vmul.f32 %v1888, 0.5
  %v1893 = vmul.f32 %v1889, 0.5
  %v1894 = vmul.f32 %v1844, %v1890
  %v1895 = vmul.f32 %v1858, %v1891
  %v1896 = vmul.f32 %v1846, %v1892
  %v1897 = vmul.f32 %v1860, %v1893
  %s1898 = scalar_lea.vmem %s7, 128
  %v1899 = vld [vmem:[%s1898] sm:$0xf]
  %v1900 = vld [vmem:[%s1898 + $0x4] sm:$0xf]
  %v1901 = vld [vmem:[%s1898 + $0x8] sm:$0xf]
  %v1902 = vld [vmem:[%s1898 + $0xc] sm:$0xf]
  %v1903 = vld [vmem:[%s1898 + $0x10] sm:$0xf]
  %v1904 = vld [vmem:[%s1898 + $0x14] sm:$0xf]
  %v1905 = vld [vmem:[%s1898 + $0x18] sm:$0xf]
  %v1906 = vld [vmem:[%s1898 + $0x1c] sm:$0xf]
  %v1907 = vld [vmem:[%s1898 + $0x20] sm:$0xf]
  %v1908 = vld [vmem:[%s1898 + $0x24] sm:$0xf]
  %v1909 = vld [vmem:[%s1898 + $0x28] sm:$0xf]
  %v1910 = vld [vmem:[%s1898 + $0x2c] sm:$0xf]
  %v1911 = vld [vmem:[%s1898 + $0x30] sm:$0xf]
  %v1912 = vld [vmem:[%s1898 + $0x34] sm:$0xf]
  %v1913 = vld [vmem:[%s1898 + $0x38] sm:$0xf]
  %v1914 = vld [vmem:[%s1898 + $0x3c] sm:$0xf]
  %v1915 = vld [vmem:[%s1898 + $0x40] sm:$0xf]
  %v1916 = vld [vmem:[%s1898 + $0x44] sm:$0xf]
  %v1917 = vld [vmem:[%s1898 + $0x48] sm:$0xf]
  %v1918 = vld [vmem:[%s1898 + $0x4c] sm:$0xf]
  %v1919 = vld [vmem:[%s1898 + $0x50] sm:$0xf]
  %v1920 = vld [vmem:[%s1898 + $0x54] sm:$0xf]
  %v1921 = vld [vmem:[%s1898 + $0x58] sm:$0xf]
  %v1922 = vld [vmem:[%s1898 + $0x5c] sm:$0xf]
  %v1923 = vld [vmem:[%s1898 + $0x60] sm:$0xf]
  %v1924 = vld [vmem:[%s1898 + $0x64] sm:$0xf]
  %v1925 = vld [vmem:[%s1898 + $0x68] sm:$0xf]
  %v1926 = vld [vmem:[%s1898 + $0x6c] sm:$0xf]
  %v1927 = vld [vmem:[%s1898 + $0x70] sm:$0xf]
  %v1928 = vld [vmem:[%s1898 + $0x74] sm:$0xf]
  %v1929 = vld [vmem:[%s1898 + $0x78] sm:$0xf]
  %v1930 = vld [vmem:[%s1898 + $0x7c] sm:$0xf]
  %v1931 = vpack.c.bf16 %v1896, %v1894
  %v1932 = vpack.c.bf16 %v1897, %v1895
  %s1933 = scalar_lea.vmem %s8, 1
  %v1934 = vld [vmem:[%s1933] sm:$0x1]
  %v1936 = vperm.slane %v1934, 0
  %v1970 = vunpack.c.l.b16 %v1899
  %v1971 = vunpack.c.l.b16 %v1900
  %v1972 = vunpack.c.l.b16 %v1901
  %v1973 = vunpack.c.l.b16 %v1902
  %v1974 = vunpack.c.l.b16 %v1903
  %v1975 = vunpack.c.l.b16 %v1904
  %v1976 = vunpack.c.l.b16 %v1905
  %v1977 = vunpack.c.l.b16 %v1906
  %v1978 = vunpack.c.l.b16 %v1907
  %v1979 = vunpack.c.l.b16 %v1908
  %v1980 = vunpack.c.l.b16 %v1909
  %v1981 = vunpack.c.l.b16 %v1910
  %v1982 = vunpack.c.l.b16 %v1911
  %v1983 = vunpack.c.l.b16 %v1912
  %v1984 = vunpack.c.l.b16 %v1913
  %v1985 = vunpack.c.l.b16 %v1914
  %v1986 = vunpack.c.l.b16 %v1915
  %v1987 = vunpack.c.l.b16 %v1916
  %v1988 = vunpack.c.l.b16 %v1917
  %v1989 = vunpack.c.l.b16 %v1918
  %v1990 = vunpack.c.l.b16 %v1919
  %v1991 = vunpack.c.l.b16 %v1920
  %v1992 = vunpack.c.l.b16 %v1921
  %v1993 = vunpack.c.l.b16 %v1922
  %v1994 = vunpack.c.l.b16 %v1923
  %v1995 = vunpack.c.l.b16 %v1924
  %v1996 = vunpack.c.l.b16 %v1925
  %v1997 = vunpack.c.l.b16 %v1926
  %v1998 = vunpack.c.l.b16 %v1927
  %v1999 = vunpack.c.l.b16 %v1928
  %v2000 = vunpack.c.l.b16 %v1929
  %v2001 = vunpack.c.l.b16 %v1930
  %v2002 = vpack.c.b16 %v1971, %v1970
  %v2003 = vpack.c.b16 %v1973, %v1972
  %v2004 = vpack.c.b16 %v1975, %v1974
  %v2005 = vpack.c.b16 %v1977, %v1976
  %v2006 = vpack.c.b16 %v1979, %v1978
  %v2007 = vpack.c.b16 %v1981, %v1980
  %v2008 = vpack.c.b16 %v1983, %v1982
  %v2009 = vpack.c.b16 %v1985, %v1984
  %v2010 = vpack.c.b16 %v1987, %v1986
  %v2011 = vpack.c.b16 %v1989, %v1988
  %v2012 = vpack.c.b16 %v1991, %v1990
  %v2013 = vpack.c.b16 %v1993, %v1992
  %v2014 = vpack.c.b16 %v1995, %v1994
  %v2015 = vpack.c.b16 %v1997, %v1996
  %v2016 = vpack.c.b16 %v1999, %v1998
  %v2017 = vpack.c.b16 %v2001, %v2000
  %2034 = vmatpush.bf16.msra.mxu0 %v2009
  %2035 = vmatpush.bf16.msra.mxu0 %v2008
  %2036 = vmatpush.bf16.msra.mxu0 %v2007
  %2037 = vmatpush.bf16.msra.mxu0 %v2006
  %2038 = vmatpush.bf16.msra.mxu0 %v2005
  %2039 = vmatpush.bf16.msra.mxu0 %v2004
  %2040 = vmatpush.bf16.msra.mxu0 %v2003
  %2041 = vmatpush.bf16.msra.mxu0 %v2002
  %2042 = vmatmul.bf16.gmra.mxu0 %v1931
  %v2043 = vpop.f32.mrf.mxu0
  %v2044 = vadd.f32 %v1936, %v2043
  %v2045 = vpop.f32.mrf.mxu0
  %v2046 = vadd.f32 %v1936, %v2045
  %2047 = vdwg.mxu0
  %2048 = vmatpush.bf16.msra.mxu0 %v2017
  %2049 = vmatpush.bf16.msra.mxu0 %v2016
  %2050 = vmatpush.bf16.msra.mxu0 %v2015
  %2051 = vmatpush.bf16.msra.mxu0 %v2014
  %2052 = vmatpush.bf16.msra.mxu0 %v2013
  %2053 = vmatpush.bf16.msra.mxu0 %v2012
  %2054 = vmatpush.bf16.msra.mxu0 %v2011
  %2055 = vmatpush.bf16.msra.mxu0 %v2010
  %2056 = vmatmul.bf16.gmra.mxu0 %v1932
  %v2057 = vpop.f32.mrf.mxu0
  %v2058 = vadd.f32 %v2044, %v2057
  %v2059 = vpop.f32.mrf.mxu0
  %v2060 = vadd.f32 %v2046, %v2059
  %2061 = vdwg.mxu0
  %v2062 = vadd.f32 %v1728, %v2058
  %v2063 = vadd.f32 %v1729, %v2060
  %v2065 = vrot.slane %v2062, 7
  %v2068 = vrot.slane %v2063, 6
  %vm2070 = vcmask 1040384
  %v2071 = vsel %vm2070, %v2065, %v2068
  %vm2072 = vcmask 517120
  %v2073 = vsel %vm2072, %v2071, 0.0
  %2074 = vadd.xlane.f32.xlu0 %v2073
  %v2075 = vpop.xlane.xlu0 %2074
  %v2076 = vmul.f32 %v2075, %v60
  %v2077 = vsub.f32 %v2071, %v2076
  %v2078 = vmul.f32 %v2077, %v2077
  %v2079 = vsel %vm2072, %v2078, 0.0
  %2080 = vadd.xlane.f32.xlu0 %v2079
  %v2081 = vpop.xlane.xlu0 %2080
  %v2082 = vmul.f32 %v2081, %v60
  %v2083 = vadd.f32 %v2082, 1e-05
  %v2084 = vrsqrt.pop %v2083
  %v2085 = vmul.f32 %v2084, %v2083
  %v2086 = vmul.f32 %v2085, %v2084
  %v2087 = vmul.f32 0.5, %v2086
  %v2088 = vsub.f32 1.5, %v2087
  %v2089 = vmul.f32 %v2084, %v2088
  %vm2090 = vweird.f32 %v2083
  %vm2091 = vweird.f32 %v2084
  %vm2092 = vmor %vm2090, %vm2091
  %v2093 = vsel %vm2092, %v2084, %v2089
  %v2094 = vmul.f32 %v2077, %v2093
  %v2095 = vld [vmem:[%s9] sm:$0xf]
  %v2096 = vld [vmem:[%s9 + $0x4] sm:$0xf]
  %v2097 = vld [vmem:[%s9 + $0x8] sm:$0xf]
  %v2098 = vld [vmem:[%s9 + $0xc] sm:$0xf]
  %v2099 = vld [vmem:[%s9 + $0x10] sm:$0xf]
  %v2100 = vld [vmem:[%s9 + $0x14] sm:$0xf]
  %v2101 = vld [vmem:[%s9 + $0x18] sm:$0xf]
  %v2102 = vld [vmem:[%s9 + $0x1c] sm:$0xf]
  %v2103 = vpack.c.bf16 %v2094, %v2094
  %v2104 = vld [vmem:[%s10] sm:$0x1]
  %v2106 = vperm.slane %v2104, 0
  %v2116 = vunpack.c.l.b16 %v2095
  %v2117 = vunpack.c.l.b16 %v2096
  %v2118 = vunpack.c.l.b16 %v2097
  %v2119 = vunpack.c.l.b16 %v2098
  %v2120 = vunpack.c.l.b16 %v2099
  %v2121 = vunpack.c.l.b16 %v2100
  %v2122 = vunpack.c.l.b16 %v2101
  %v2123 = vunpack.c.l.b16 %v2102
  %v2124 = vpack.c.b16 %v2117, %v2116
  %v2125 = vpack.c.b16 %v2119, %v2118
  %v2126 = vpack.c.b16 %v2121, %v2120
  %v2127 = vpack.c.b16 %v2123, %v2122
  %v2133 = vsel %vm47, %v2103, 0
  %2135 = vmatpush.bf16.msra.mxu0 0
  %2136 = vmatpush.bf16.msra.mxu0 0
  %2137 = vmatpush.bf16.msra.mxu0 0
  %2138 = vmatpush.bf16.msra.mxu0 0
  %2139 = vmatpush.bf16.msra.mxu0 %v2127
  %2140 = vmatpush.bf16.msra.mxu0 %v2126
  %2141 = vmatpush.bf16.msra.mxu0 %v2125
  %2142 = vmatpush.bf16.msra.mxu0 %v2124
  %2143 = vmatmul.bf16.gmra.mxu0 %v2133
  %v2144 = vpop.f32.mrf.mxu0
  %v2145 = vadd.f32 %v2106, %v2144
  %v2146 = vpop.f32.mrf.mxu0
  %2147 = vdwg.mxu0
  %vm2148 = vcmask 1041408
  %v2149 = vsel %vm2148, %v2145, 0.0
  %2150 = vst [vmem:[%s11] sm:$0xff] %v2149
  // Predicated region
  $region46: #{gpt2_forward.1} parent=0 // pred_check
    _
  $region47: #{gpt2_forward.1} parent=0 // pred_check_branch
    %2152 = sbr.rel (0) target = $region49
  $region48: #{gpt2_forward.1} parent=0 // pred_region
    _
  $region49: #{gpt2_forward.1} parent=0 // pred_fallthru
    _
  // Predicated region
  $region50: #{gpt2_forward.1} parent=0 // pred_check
    _
  $region51: #{gpt2_forward.1} parent=0 // pred_check_branch
    %2154 = sbr.rel (0) target = $region53
  $region52: #{gpt2_forward.1} parent=0 // pred_region
    _
  $region53: #{gpt2_forward.1} parent=0 // pred_fallthru
    _

</llo_original>
